<compile_context>
chip_gen: v5e
topology: v5e:2x2
jax: 0.10.0
libtpu: 0.0.40
codegen_flags: <defaults>
</compile_context>

<pallas_src>
import functools

import jax
import jax.numpy as jnp
from jax import lax
from jax.experimental import pallas as pl
from jax.experimental.pallas import tpu as pltpu


def _merge_kernel(x1_ref, x2p_ref, w2_ref, w3_ref, pp_ref, br_ref, out_ref, *,
                  H, W, nb, rd):
    HW = H * W
    L = nb * HW                            # lanes handled by this grid step
    C = out_ref.shape[0]
    C2 = 2 * C

    # ---- unpack the consolidated small-parameter operand -------------------
    pp = pp_ref[...]                       # (C2, 5 + 2*rd) f32
    gamma = pp[:, 0:1]                     # (C2, 1) LayerNorm weight
    beta = pp[:, 1:2]                      # (C2, 1) LayerNorm bias
    be = pp[:, 2:3]                        # (C2, 1) SE expand bias (column)
    b2 = pp[:C, 3:4]                       # (C, 1)  conv_change bias
    b3 = pp[:C, 4:5]                       # (C, 1)  conv3x3 bias
    wr = pp[:, 5:5 + rd]                   # (C2, rd) SE reduce weight
    we = pp[:, 5 + rd:5 + 2 * rd]          # (C2, rd) SE expand weight (transposed)
    br = br_ref[...]                       # (1, rd)  SE reduce bias

    # ---- conv_change: Conv2d(k=2, s=2) as ONE bf16 matmul, Nb-image-wide RHS
    x2c = jnp.dot(w2_ref[...], x2p_ref[...],
                  preferred_element_type=jnp.float32) + b2          # (C, L)

    # ---- channel concat (channels on the sublane axis) ---------------------
    merge = jnp.concatenate([x1_ref[...], x2c], axis=0)             # (C2, L)

    # ---- LayerNorm over channels (channels_first, biased variance) ---------
    u = jnp.mean(merge, axis=0, keepdims=True)                      # (1, L)
    d = merge - u
    s = jnp.mean(d * d, axis=0, keepdims=True)                      # (1, L)
    ln = d * lax.rsqrt(s + 1e-6) * gamma + beta                     # (C2, L)

    # ---- SqueezeExcite: per-image (C2,1) gate column, one broadcast multiply
    slabs = []
    for j in range(nb):                    # static, small
        slab = ln[:, j * HW:(j + 1) * HW]                            # lane-aligned
        pooled = jnp.mean(slab, axis=1, keepdims=True)               # (C2, 1)
        r = jnp.maximum(
            jnp.sum(wr * pooled, axis=0, keepdims=True) + br, 0.0)   # (1, rd)
        gate = jax.nn.sigmoid(
            jnp.sum(we * r, axis=1, keepdims=True) + be)             # (C2, 1)
        slabs.append(slab * gate)          # gate is spatially constant per image
    scaled = slabs[0] if nb == 1 else jnp.concatenate(slabs, axis=1)  # (C2, L)

    # ---- 3x3 conv, padding=1: 9 taps via XLU rolls + edge masks, one matmul
    lane = lax.broadcasted_iota(jnp.int32, (1, L), 1)
    pos = lane % HW                        # flattened position within its image
    col = lane % W                         # column within its row
    taps = []
    for dh in (-1, 0, 1):
        for dw in (-1, 0, 1):
            k = dh * W + dw
            t = scaled if k == 0 else pltpu.roll(scaled, shift=(-k) % L, axis=1)
            conds = []
            if dh == -1:
                conds.append(pos >= W)            # no row above (top of image)
            elif dh == 1:
                conds.append(pos < HW - W)        # no row below (bottom of image)
            if dw == -1:
                conds.append(col >= 1)            # left edge
            elif dw == 1:
                conds.append(col <= W - 2)        # right edge
            if conds:
                valid = conds[0]
                for c_ in conds[1:]:
                    valid = jnp.logical_and(valid, c_)
                t = jnp.where(valid, t, 0.0)
            taps.append(t.astype(jnp.bfloat16))
    # NOTE: at C2 > ~32 move the taps into a VMEM scratch via lax.fori_loop
    # (or chunk K) to keep vreg pressure flat; at C2=16 they fit.
    s_all = jnp.concatenate(taps, axis=0)                            # (9*C2, L) bf16

    out = jnp.dot(w3_ref[...], s_all, preferred_element_type=jnp.float32) + b3
    # NOTE: consumer could take bf16 here to halve writeback; kept f32 for the
    # f32 reference check.
    out_ref[...] = out.astype(out_ref.dtype)                         # dense store


def _pick_batch_block(n):
    """Largest Nb dividing N that still leaves >=2 grid steps (v7x 2-TC sharding)."""
    if n <= 1:
        return 1
    for nb in range(n // 2, 0, -1):
        if n % nb == 0:
            return nb
    return 1


def merge_c2f_d_lsc3x3_forward(x1_nchw, x2_nchw, params, batch_block=None):
    """type='down' forward. x1: (N, C, H, W), x2: (N, Cin, 2H, 2W) -> (N, C, H, W)."""
    w2, b2, gamma, beta, wr, br, we, be, w3, b3 = params
    N, C, H, W = x1_nchw.shape
    _, Cin, H2, W2 = x2_nchw.shape
    assert H2 == 2 * H and W2 == 2 * W
    HW = H * W
    C2 = 2 * C
    rd = wr.shape[1]

    nb = batch_block if batch_block is not None else _pick_batch_block(N)
    assert N % nb == 0
    G = N // nb
    L = nb * HW

    # Channels-on-sublane, (batch*spatial)-on-lane layout: (channels, N*H*W).
    x1f = x1_nchw.transpose(1, 0, 2, 3).reshape(C, N * HW)
    # space-to-depth for the 2x2 / stride-2 conv; K order = (kh, kw, cin).
    x2p = (x2_nchw.reshape(N, Cin, H, 2, W, 2)
           .transpose(3, 5, 1, 0, 2, 4)                  # (kh, kw, ci, n, h, w)
           .reshape(4 * Cin, N * HW)
           .astype(jnp.bfloat16))

    w2c = w2.reshape(4 * Cin, C).T.astype(jnp.bfloat16)                  # (C, 4*Cin)
    w3c = jnp.transpose(w3, (3, 0, 1, 2)).reshape(C, 9 * C2).astype(jnp.bfloat16)

    # Pack per-channel vectors + tiny SE matrices into one operand (one DMA).
    ncols = 5 + 2 * rd
    pp = jnp.zeros((C2, ncols), jnp.float32)
    pp = pp.at[:, 0].set(gamma)
    pp = pp.at[:, 1].set(beta)
    pp = pp.at[:, 2].set(be)
    pp = pp.at[:C, 3].set(b2)
    pp = pp.at[:C, 4].set(b3)
    pp = pp.at[:, 5:5 + rd].set(wr)              # (C2, rd)
    pp = pp.at[:, 5 + rd:5 + 2 * rd].set(we.T)   # (C2, rd): expand weight transposed

    kernel = functools.partial(_merge_kernel, H=H, W=W, nb=nb, rd=rd)

    out = pl.pallas_call(
        kernel,
        out_shape=jax.ShapeDtypeStruct((C, N * HW), jnp.float32),
        grid_spec=pltpu.PrefetchScalarGridSpec(
            num_scalar_prefetch=0,
            grid=(G,),
            in_specs=[
                pl.BlockSpec((C, L), lambda g: (0, g)),
                pl.BlockSpec((4 * Cin, L), lambda g: (0, g)),
                pl.BlockSpec((C, 4 * Cin), lambda g: (0, 0)),
                pl.BlockSpec((C, 9 * C2), lambda g: (0, 0)),
                pl.BlockSpec((C2, ncols), lambda g: (0, 0)),
                pl.BlockSpec((1, rd), lambda g: (0, 0)),
            ],
            out_specs=pl.BlockSpec((C, L), lambda g: (0, g)),
        ),
        # "parallel" only matters on v7x (2 TensorCores); it is a no-op on the
        # single-TC v5e/v6e, where the win comes from the wider per-step block.
        compiler_params=pltpu.CompilerParams(
            dimension_semantics=("parallel",)),
    )(x1f, x2p, w2c, w3c, pp, br.reshape(1, rd))

    return out.reshape(C, N, H, W).transpose(1, 0, 2, 3)              # NCHW


def _reference_forward(x1_nchw, x2_nchw, params):
    """Pure-JAX reference (NHWC convs, f32 HIGHEST precision) for verification."""
    w2, b2, gamma, beta, wr, br, we, be, w3, b3 = params
    x1 = jnp.transpose(x1_nchw, (0, 2, 3, 1))
    x2 = jnp.transpose(x2_nchw, (0, 2, 3, 1))
    dn = ('NHWC', 'HWIO', 'NHWC')
    x2c = lax.conv_general_dilated(x2, w2, (2, 2), 'VALID',
                                   dimension_numbers=dn,
                                   precision=lax.Precision.HIGHEST) + b2
    merge = jnp.concatenate([x1, x2c], axis=-1)
    u = merge.mean(-1, keepdims=True)
    s = ((merge - u) ** 2).mean(-1, keepdims=True)
    ln = (merge - u) / jnp.sqrt(s + 1e-6) * gamma + beta
    pooled = ln.mean(axis=(1, 2))                                     # (N, 2C)
    r = jax.nn.relu(pooled @ wr + br)
    gate = jax.nn.sigmoid(r @ we + be)
    scaled = ln * gate[:, None, None, :]
    out = lax.conv_general_dilated(scaled, w3, (1, 1), 'SAME',
                                   dimension_numbers=dn,
                                   precision=lax.Precision.HIGHEST) + b3
    return jnp.transpose(out, (0, 3, 1, 2))


if __name__ == "__main__":
    in_ch, out_ch = 4, 8
    N, H, W = 4, 16, 16          # N=4 -> Nb=2 images per grid step, grid=(2,)
    C2 = 2 * out_ch
    rd = round(C2 * 0.25)        # SqueezeExcite rd_ratio=0.25 -> 4

    key = jax.random.PRNGKey(0)
    ks = jax.random.split(key, 12)
    # deterministic synthetic parameters (shapes from the module __init__)
    w2 = 0.1 * jax.random.normal(ks[0], (2, 2, in_ch, out_ch), jnp.float32)   # conv_change (HWIO)
    b2 = 0.1 * jax.random.normal(ks[1], (out_ch,), jnp.float32)
    gamma = 1.0 + 0.1 * jax.random.normal(ks[2], (C2,), jnp.float32)          # LayerNorm weight
    beta = 0.1 * jax.random.normal(ks[3], (C2,), jnp.float32)                 # LayerNorm bias
    wr = 0.1 * jax.random.normal(ks[4], (C2, rd), jnp.float32)                # SE conv_reduce
    br = 0.1 * jax.random.normal(ks[5], (rd,), jnp.float32)
    we = 0.1 * jax.random.normal(ks[6], (rd, C2), jnp.float32)                # SE conv_expand
    be = 0.1 * jax.random.normal(ks[7], (C2,), jnp.float32)
    w3 = 0.1 * jax.random.normal(ks[8], (3, 3, C2, out_ch), jnp.float32)      # 3x3 conv (HWIO)
    b3 = 0.1 * jax.random.normal(ks[9], (out_ch,), jnp.float32)
    params = (w2, b2, gamma, beta, wr, br, we, be, w3, b3)

    x1 = jax.random.normal(ks[10], (N, out_ch, H, W), jnp.float32)            # NCHW
    x2 = jax.random.normal(ks[11], (N, in_ch, 2 * H, 2 * W), jnp.float32)     # NCHW

    out = merge_c2f_d_lsc3x3_forward(x1, x2, params)
    out = jax.block_until_ready(out)

    ref = jax.block_until_ready(_reference_forward(x1, x2, params))
    assert out.shape == (N, out_ch, H, W)
    # bf16 MXU operands vs f32-HIGHEST reference -> relaxed tolerance.
    err = jnp.max(jnp.abs(out - ref))
    assert jnp.allclose(out, ref, atol=2e-2, rtol=2e-2), f"max abs err {err}"
    print("KERNEL_OK")
</pallas_src>

<mosaic_0001>
module attributes {stable_mosaic.version = 11 : i64} {
  func.func @_merge_kernel(%arg0: i32, %arg1: memref<8x512xf32, #tpu.memory_space<vmem>>, %arg2: memref<16x512xbf16, #tpu.memory_space<vmem>>, %arg3: memref<8x16xbf16, #tpu.memory_space<vmem>>, %arg4: memref<8x144xbf16, #tpu.memory_space<vmem>>, %arg5: memref<16x13xf32, #tpu.memory_space<vmem>>, %arg6: memref<1x4xf32, #tpu.memory_space<vmem>>, %arg7: memref<8x512xf32, #tpu.memory_space<vmem>>) attributes {dimension_semantics = [#tpu.dimension_semantics<parallel>], iteration_bounds = array<i64: 2>, scalar_prefetch = 0 : i64, scratch_operands = 0 : i64, tpu.core_type = #tpu.core_type<tc>, window_params = [{transform_indices = @transform_0, window_bounds = array<i64: 8, 512>}, {transform_indices = @transform_1, window_bounds = array<i64: 16, 512>}, {pipeline_mode = #tpu.pipeline_mode<synchronous>, transform_indices = @transform_2, window_bounds = array<i64: 8, 16>}, {pipeline_mode = #tpu.pipeline_mode<synchronous>, transform_indices = @transform_3, window_bounds = array<i64: 8, 144>}, {pipeline_mode = #tpu.pipeline_mode<synchronous>, transform_indices = @transform_4, window_bounds = array<i64: 16, 13>}, {pipeline_mode = #tpu.pipeline_mode<synchronous>, transform_indices = @transform_5, window_bounds = array<i64: 1, 4>}, {transform_indices = @transform_6, window_bounds = array<i64: 8, 512>}]} {
    %c0 = arith.constant 0 : index
    %c0_0 = arith.constant 0 : index
    %0 = vector.load %arg5[%c0, %c0_0] : memref<16x13xf32, #tpu.memory_space<vmem>>, vector<16x13xf32>
    %1 = vector.extract_strided_slice %0 {offsets = [0, 0], sizes = [16, 1], strides = [1, 1]} : vector<16x13xf32> to vector<16x1xf32>
    %2 = vector.extract_strided_slice %0 {offsets = [0, 1], sizes = [16, 1], strides = [1, 1]} : vector<16x13xf32> to vector<16x1xf32>
    %3 = vector.extract_strided_slice %0 {offsets = [0, 2], sizes = [16, 1], strides = [1, 1]} : vector<16x13xf32> to vector<16x1xf32>
    %4 = vector.extract_strided_slice %0 {offsets = [0, 3], sizes = [8, 1], strides = [1, 1]} : vector<16x13xf32> to vector<8x1xf32>
    %5 = vector.extract_strided_slice %0 {offsets = [0, 4], sizes = [8, 1], strides = [1, 1]} : vector<16x13xf32> to vector<8x1xf32>
    %6 = vector.extract_strided_slice %0 {offsets = [0, 5], sizes = [16, 4], strides = [1, 1]} : vector<16x13xf32> to vector<16x4xf32>
    %7 = vector.extract_strided_slice %0 {offsets = [0, 9], sizes = [16, 4], strides = [1, 1]} : vector<16x13xf32> to vector<16x4xf32>
    %c0_1 = arith.constant 0 : index
    %c0_2 = arith.constant 0 : index
    %8 = vector.load %arg6[%c0_1, %c0_2] : memref<1x4xf32, #tpu.memory_space<vmem>>, vector<1x4xf32>
    %c0_3 = arith.constant 0 : index
    %c0_4 = arith.constant 0 : index
    %9 = vector.load %arg3[%c0_3, %c0_4] : memref<8x16xbf16, #tpu.memory_space<vmem>>, vector<8x16xbf16>
    %c0_5 = arith.constant 0 : index
    %c0_6 = arith.constant 0 : index
    %10 = vector.load %arg2[%c0_5, %c0_6] : memref<16x512xbf16, #tpu.memory_space<vmem>>, vector<16x512xbf16>
    %cst = arith.constant dense<0.000000e+00> : vector<8x512xf32>
    %11 = tpu.matmul %9, %10, %cst {dimension_numbers = #tpu.dot_dimension_numbers<[1], [0], [0], [1], [0, 0, 1, 1], [], []>} : vector<8x16xbf16>, vector<16x512xbf16>, vector<8x512xf32> -> vector<8x512xf32>
    %12 = vector.broadcast %4 : vector<8x1xf32> to vector<8x512xf32>
    %13 = arith.addf %11, %12 : vector<8x512xf32>
    %c0_7 = arith.constant 0 : index
    %c0_8 = arith.constant 0 : index
    %14 = vector.load %arg1[%c0_7, %c0_8] : memref<8x512xf32, #tpu.memory_space<vmem>>, vector<8x512xf32>
    %15 = tpu.concatenate %14, %13 in 0 : vector<8x512xf32>, vector<8x512xf32> -> vector<16x512xf32>
    %cst_9 = arith.constant dense<0.000000e+00> : vector<512xf32>
    %16 = vector.multi_reduction <add>, %15, %cst_9 [0] : vector<16x512xf32> to vector<512xf32>
    %17 = vector.shape_cast %16 : vector<512xf32> to vector<1x512xf32>
    %cst_10 = arith.constant 1.600000e+01 : f32
    %18 = vector.broadcast %cst_10 : f32 to vector<1x512xf32>
    %19 = arith.divf %17, %18 : vector<1x512xf32>
    %20 = vector.broadcast %19 : vector<1x512xf32> to vector<16x512xf32>
    %21 = arith.subf %15, %20 : vector<16x512xf32>
    %22 = arith.mulf %21, %21 : vector<16x512xf32>
    %cst_11 = arith.constant dense<0.000000e+00> : vector<512xf32>
    %23 = vector.multi_reduction <add>, %22, %cst_11 [0] : vector<16x512xf32> to vector<512xf32>
    %24 = vector.shape_cast %23 : vector<512xf32> to vector<1x512xf32>
    %cst_12 = arith.constant 1.600000e+01 : f32
    %25 = vector.broadcast %cst_12 : f32 to vector<1x512xf32>
    %26 = arith.divf %24, %25 : vector<1x512xf32>
    %cst_13 = arith.constant 9.99999997E-7 : f32
    %27 = vector.broadcast %cst_13 : f32 to vector<1x512xf32>
    %28 = arith.addf %26, %27 : vector<1x512xf32>
    %29 = math.rsqrt %28 : vector<1x512xf32>
    %30 = vector.broadcast %29 : vector<1x512xf32> to vector<16x512xf32>
    %31 = arith.mulf %21, %30 : vector<16x512xf32>
    %32 = vector.broadcast %1 : vector<16x1xf32> to vector<16x512xf32>
    %33 = arith.mulf %31, %32 : vector<16x512xf32>
    %34 = vector.broadcast %2 : vector<16x1xf32> to vector<16x512xf32>
    %35 = arith.addf %33, %34 : vector<16x512xf32>
    %36 = vector.extract_strided_slice %35 {offsets = [0, 0], sizes = [16, 256], strides = [1, 1]} : vector<16x512xf32> to vector<16x256xf32>
    %cst_14 = arith.constant dense<0.000000e+00> : vector<16xf32>
    %37 = vector.multi_reduction <add>, %36, %cst_14 [1] : vector<16x256xf32> to vector<16xf32>
    %38 = vector.shape_cast %37 : vector<16xf32> to vector<16x1xf32>
    %cst_15 = arith.constant 2.560000e+02 : f32
    %39 = vector.broadcast %cst_15 : f32 to vector<16x1xf32>
    %40 = arith.divf %38, %39 : vector<16x1xf32>
    %41 = vector.broadcast %40 : vector<16x1xf32> to vector<16x4xf32>
    %42 = arith.mulf %6, %41 : vector<16x4xf32>
    %cst_16 = arith.constant dense<0.000000e+00> : vector<4xf32>
    %43 = vector.multi_reduction <add>, %42, %cst_16 [0] : vector<16x4xf32> to vector<4xf32>
    %44 = vector.shape_cast %43 : vector<4xf32> to vector<1x4xf32>
    %45 = arith.addf %44, %8 : vector<1x4xf32>
    %cst_17 = arith.constant 0.000000e+00 : f32
    %46 = vector.broadcast %cst_17 : f32 to vector<1x4xf32>
    %47 = arith.maximumf %45, %46 : vector<1x4xf32>
    %48 = vector.broadcast %47 : vector<1x4xf32> to vector<16x4xf32>
    %49 = arith.mulf %7, %48 : vector<16x4xf32>
    %cst_18 = arith.constant dense<0.000000e+00> : vector<16xf32>
    %50 = vector.multi_reduction <add>, %49, %cst_18 [1] : vector<16x4xf32> to vector<16xf32>
    %51 = vector.shape_cast %50 : vector<16xf32> to vector<16x1xf32>
    %52 = arith.addf %51, %3 : vector<16x1xf32>
    %53 = arith.negf %52 : vector<16x1xf32>
    %54 = math.exp %53 : vector<16x1xf32>
    %cst_19 = arith.constant 1.000000e+00 : f32
    %55 = vector.broadcast %cst_19 : f32 to vector<16x1xf32>
    %56 = arith.addf %55, %54 : vector<16x1xf32>
    %57 = arith.divf %55, %56 : vector<16x1xf32>
    %58 = vector.broadcast %57 : vector<16x1xf32> to vector<16x256xf32>
    %59 = arith.mulf %36, %58 : vector<16x256xf32>
    %60 = vector.extract_strided_slice %35 {offsets = [0, 256], sizes = [16, 256], strides = [1, 1]} : vector<16x512xf32> to vector<16x256xf32>
    %cst_20 = arith.constant dense<0.000000e+00> : vector<16xf32>
    %61 = vector.multi_reduction <add>, %60, %cst_20 [1] : vector<16x256xf32> to vector<16xf32>
    %62 = vector.shape_cast %61 : vector<16xf32> to vector<16x1xf32>
    %cst_21 = arith.constant 2.560000e+02 : f32
    %63 = vector.broadcast %cst_21 : f32 to vector<16x1xf32>
    %64 = arith.divf %62, %63 : vector<16x1xf32>
    %65 = vector.broadcast %64 : vector<16x1xf32> to vector<16x4xf32>
    %66 = arith.mulf %6, %65 : vector<16x4xf32>
    %cst_22 = arith.constant dense<0.000000e+00> : vector<4xf32>
    %67 = vector.multi_reduction <add>, %66, %cst_22 [0] : vector<16x4xf32> to vector<4xf32>
    %68 = vector.shape_cast %67 : vector<4xf32> to vector<1x4xf32>
    %69 = arith.addf %68, %8 : vector<1x4xf32>
    %cst_23 = arith.constant 0.000000e+00 : f32
    %70 = vector.broadcast %cst_23 : f32 to vector<1x4xf32>
    %71 = arith.maximumf %69, %70 : vector<1x4xf32>
    %72 = vector.broadcast %71 : vector<1x4xf32> to vector<16x4xf32>
    %73 = arith.mulf %7, %72 : vector<16x4xf32>
    %cst_24 = arith.constant dense<0.000000e+00> : vector<16xf32>
    %74 = vector.multi_reduction <add>, %73, %cst_24 [1] : vector<16x4xf32> to vector<16xf32>
    %75 = vector.shape_cast %74 : vector<16xf32> to vector<16x1xf32>
    %76 = arith.addf %75, %3 : vector<16x1xf32>
    %77 = arith.negf %76 : vector<16x1xf32>
    %78 = math.exp %77 : vector<16x1xf32>
    %cst_25 = arith.constant 1.000000e+00 : f32
    %79 = vector.broadcast %cst_25 : f32 to vector<16x1xf32>
    %80 = arith.addf %79, %78 : vector<16x1xf32>
    %81 = arith.divf %79, %80 : vector<16x1xf32>
    %82 = vector.broadcast %81 : vector<16x1xf32> to vector<16x256xf32>
    %83 = arith.mulf %60, %82 : vector<16x256xf32>
    %84 = tpu.concatenate %59, %83 in 1 : vector<16x256xf32>, vector<16x256xf32> -> vector<16x512xf32>
    %85 = tpu.iota {dimensions = array<i32: 1>} : vector<1x512xi32>
    %c256_i32 = arith.constant 256 : i32
    %c0_i32 = arith.constant 0 : i32
    %86 = arith.cmpi eq, %c256_i32, %c0_i32 : i32
    %c1_i32 = arith.constant 1 : i32
    %87 = arith.select %86, %c1_i32, %c256_i32 : i32
    %88 = vector.broadcast %87 : i32 to vector<1x512xi32>
    %89 = arith.remsi %85, %88 : vector<1x512xi32>
    %c0_i32_26 = arith.constant 0 : i32
    %90 = vector.broadcast %c0_i32_26 : i32 to vector<1x512xi32>
    %91 = arith.cmpi ne, %89, %90 : vector<1x512xi32>
    %c0_i32_27 = arith.constant 0 : i32
    %92 = vector.broadcast %c0_i32_27 : i32 to vector<1x512xi32>
    %93 = arith.cmpi slt, %89, %92 : vector<1x512xi32>
    %c0_i32_28 = arith.constant 0 : i32
    %94 = arith.cmpi slt, %87, %c0_i32_28 : i32
    %95 = vector.broadcast %94 : i1 to vector<1x512xi1>
    %96 = vector.broadcast %95 : vector<1x512xi1> to vector<1x512xi1>
    %97 = arith.xori %93, %96 : vector<1x512xi1>
    %98 = arith.andi %97, %91 : vector<1x512xi1>
    %99 = vector.broadcast %87 : i32 to vector<1x512xi32>
    %100 = arith.addi %89, %99 : vector<1x512xi32>
    %101 = arith.select %98, %100, %89 : vector<1x512xi1>, vector<1x512xi32>
    %c16_i32 = arith.constant 16 : i32
    %c0_i32_29 = arith.constant 0 : i32
    %102 = arith.cmpi eq, %c16_i32, %c0_i32_29 : i32
    %c1_i32_30 = arith.constant 1 : i32
    %103 = arith.select %102, %c1_i32_30, %c16_i32 : i32
    %104 = vector.broadcast %103 : i32 to vector<1x512xi32>
    %105 = arith.remsi %85, %104 : vector<1x512xi32>
    %c0_i32_31 = arith.constant 0 : i32
    %106 = vector.broadcast %c0_i32_31 : i32 to vector<1x512xi32>
    %107 = arith.cmpi ne, %105, %106 : vector<1x512xi32>
    %c0_i32_32 = arith.constant 0 : i32
    %108 = vector.broadcast %c0_i32_32 : i32 to vector<1x512xi32>
    %109 = arith.cmpi slt, %105, %108 : vector<1x512xi32>
    %c0_i32_33 = arith.constant 0 : i32
    %110 = arith.cmpi slt, %103, %c0_i32_33 : i32
    %111 = vector.broadcast %110 : i1 to vector<1x512xi1>
    %112 = vector.broadcast %111 : vector<1x512xi1> to vector<1x512xi1>
    %113 = arith.xori %109, %112 : vector<1x512xi1>
    %114 = arith.andi %113, %107 : vector<1x512xi1>
    %115 = vector.broadcast %103 : i32 to vector<1x512xi32>
    %116 = arith.addi %105, %115 : vector<1x512xi32>
    %117 = arith.select %114, %116, %105 : vector<1x512xi1>, vector<1x512xi32>
    %c17_i32 = arith.constant 17 : i32
    %118 = tpu.dynamic_rotate %84 by %c17_i32 dim 1 : vector<16x512xf32>, i32 -> vector<16x512xf32>
    %c16_i32_34 = arith.constant 16 : i32
    %119 = vector.broadcast %c16_i32_34 : i32 to vector<1x512xi32>
    %120 = arith.cmpi sge, %101, %119 : vector<1x512xi32>
    %c1_i32_35 = arith.constant 1 : i32
    %121 = vector.broadcast %c1_i32_35 : i32 to vector<1x512xi32>
    %122 = arith.cmpi sge, %117, %121 : vector<1x512xi32>
    %123 = arith.andi %120, %122 : vector<1x512xi1>
    %cst_36 = arith.constant 0.000000e+00 : f32
    %124 = vector.shape_cast %123 : vector<1x512xi1> to vector<1x512xi1>
    %125 = vector.broadcast %124 : vector<1x512xi1> to vector<16x512xi1>
    %126 = vector.broadcast %cst_36 : f32 to vector<16x512xf32>
    %127 = arith.select %125, %118, %126 : vector<16x512xi1>, vector<16x512xf32>
    %128 = arith.truncf %127 : vector<16x512xf32> to vector<16x512xbf16>
    %c16_i32_37 = arith.constant 16 : i32
    %129 = tpu.dynamic_rotate %84 by %c16_i32_37 dim 1 : vector<16x512xf32>, i32 -> vector<16x512xf32>
    %c16_i32_38 = arith.constant 16 : i32
    %130 = vector.broadcast %c16_i32_38 : i32 to vector<1x512xi32>
    %131 = arith.cmpi sge, %101, %130 : vector<1x512xi32>
    %cst_39 = arith.constant 0.000000e+00 : f32
    %132 = vector.shape_cast %131 : vector<1x512xi1> to vector<1x512xi1>
    %133 = vector.broadcast %132 : vector<1x512xi1> to vector<16x512xi1>
    %134 = vector.broadcast %cst_39 : f32 to vector<16x512xf32>
    %135 = arith.select %133, %129, %134 : vector<16x512xi1>, vector<16x512xf32>
    %136 = arith.truncf %135 : vector<16x512xf32> to vector<16x512xbf16>
    %c15_i32 = arith.constant 15 : i32
    %137 = tpu.dynamic_rotate %84 by %c15_i32 dim 1 : vector<16x512xf32>, i32 -> vector<16x512xf32>
    %c16_i32_40 = arith.constant 16 : i32
    %138 = vector.broadcast %c16_i32_40 : i32 to vector<1x512xi32>
    %139 = arith.cmpi sge, %101, %138 : vector<1x512xi32>
    %c14_i32 = arith.constant 14 : i32
    %140 = vector.broadcast %c14_i32 : i32 to vector<1x512xi32>
    %141 = arith.cmpi sle, %117, %140 : vector<1x512xi32>
    %142 = arith.andi %139, %141 : vector<1x512xi1>
    %cst_41 = arith.constant 0.000000e+00 : f32
    %143 = vector.shape_cast %142 : vector<1x512xi1> to vector<1x512xi1>
    %144 = vector.broadcast %143 : vector<1x512xi1> to vector<16x512xi1>
    %145 = vector.broadcast %cst_41 : f32 to vector<16x512xf32>
    %146 = arith.select %144, %137, %145 : vector<16x512xi1>, vector<16x512xf32>
    %147 = arith.truncf %146 : vector<16x512xf32> to vector<16x512xbf16>
    %c1_i32_42 = arith.constant 1 : i32
    %148 = tpu.dynamic_rotate %84 by %c1_i32_42 dim 1 : vector<16x512xf32>, i32 -> vector<16x512xf32>
    %c1_i32_43 = arith.constant 1 : i32
    %149 = vector.broadcast %c1_i32_43 : i32 to vector<1x512xi32>
    %150 = arith.cmpi sge, %117, %149 : vector<1x512xi32>
    %cst_44 = arith.constant 0.000000e+00 : f32
    %151 = vector.shape_cast %150 : vector<1x512xi1> to vector<1x512xi1>
    %152 = vector.broadcast %151 : vector<1x512xi1> to vector<16x512xi1>
    %153 = vector.broadcast %cst_44 : f32 to vector<16x512xf32>
    %154 = arith.select %152, %148, %153 : vector<16x512xi1>, vector<16x512xf32>
    %155 = arith.truncf %154 : vector<16x512xf32> to vector<16x512xbf16>
    %156 = arith.truncf %84 : vector<16x512xf32> to vector<16x512xbf16>
    %c511_i32 = arith.constant 511 : i32
    %157 = tpu.dynamic_rotate %84 by %c511_i32 dim 1 : vector<16x512xf32>, i32 -> vector<16x512xf32>
    %c14_i32_45 = arith.constant 14 : i32
    %158 = vector.broadcast %c14_i32_45 : i32 to vector<1x512xi32>
    %159 = arith.cmpi sle, %117, %158 : vector<1x512xi32>
    %cst_46 = arith.constant 0.000000e+00 : f32
    %160 = vector.shape_cast %159 : vector<1x512xi1> to vector<1x512xi1>
    %161 = vector.broadcast %160 : vector<1x512xi1> to vector<16x512xi1>
    %162 = vector.broadcast %cst_46 : f32 to vector<16x512xf32>
    %163 = arith.select %161, %157, %162 : vector<16x512xi1>, vector<16x512xf32>
    %164 = arith.truncf %163 : vector<16x512xf32> to vector<16x512xbf16>
    %c497_i32 = arith.constant 497 : i32
    %165 = tpu.dynamic_rotate %84 by %c497_i32 dim 1 : vector<16x512xf32>, i32 -> vector<16x512xf32>
    %c240_i32 = arith.constant 240 : i32
    %166 = vector.broadcast %c240_i32 : i32 to vector<1x512xi32>
    %167 = arith.cmpi slt, %101, %166 : vector<1x512xi32>
    %c1_i32_47 = arith.constant 1 : i32
    %168 = vector.broadcast %c1_i32_47 : i32 to vector<1x512xi32>
    %169 = arith.cmpi sge, %117, %168 : vector<1x512xi32>
    %170 = arith.andi %167, %169 : vector<1x512xi1>
    %cst_48 = arith.constant 0.000000e+00 : f32
    %171 = vector.shape_cast %170 : vector<1x512xi1> to vector<1x512xi1>
    %172 = vector.broadcast %171 : vector<1x512xi1> to vector<16x512xi1>
    %173 = vector.broadcast %cst_48 : f32 to vector<16x512xf32>
    %174 = arith.select %172, %165, %173 : vector<16x512xi1>, vector<16x512xf32>
    %175 = arith.truncf %174 : vector<16x512xf32> to vector<16x512xbf16>
    %c496_i32 = arith.constant 496 : i32
    %176 = tpu.dynamic_rotate %84 by %c496_i32 dim 1 : vector<16x512xf32>, i32 -> vector<16x512xf32>
    %c240_i32_49 = arith.constant 240 : i32
    %177 = vector.broadcast %c240_i32_49 : i32 to vector<1x512xi32>
    %178 = arith.cmpi slt, %101, %177 : vector<1x512xi32>
    %cst_50 = arith.constant 0.000000e+00 : f32
    %179 = vector.shape_cast %178 : vector<1x512xi1> to vector<1x512xi1>
    %180 = vector.broadcast %179 : vector<1x512xi1> to vector<16x512xi1>
    %181 = vector.broadcast %cst_50 : f32 to vector<16x512xf32>
    %182 = arith.select %180, %176, %181 : vector<16x512xi1>, vector<16x512xf32>
    %183 = arith.truncf %182 : vector<16x512xf32> to vector<16x512xbf16>
    %c495_i32 = arith.constant 495 : i32
    %184 = tpu.dynamic_rotate %84 by %c495_i32 dim 1 : vector<16x512xf32>, i32 -> vector<16x512xf32>
    %c240_i32_51 = arith.constant 240 : i32
    %185 = vector.broadcast %c240_i32_51 : i32 to vector<1x512xi32>
    %186 = arith.cmpi slt, %101, %185 : vector<1x512xi32>
    %c14_i32_52 = arith.constant 14 : i32
    %187 = vector.broadcast %c14_i32_52 : i32 to vector<1x512xi32>
    %188 = arith.cmpi sle, %117, %187 : vector<1x512xi32>
    %189 = arith.andi %186, %188 : vector<1x512xi1>
    %cst_53 = arith.constant 0.000000e+00 : f32
    %190 = vector.shape_cast %189 : vector<1x512xi1> to vector<1x512xi1>
    %191 = vector.broadcast %190 : vector<1x512xi1> to vector<16x512xi1>
    %192 = vector.broadcast %cst_53 : f32 to vector<16x512xf32>
    %193 = arith.select %191, %184, %192 : vector<16x512xi1>, vector<16x512xf32>
    %194 = arith.truncf %193 : vector<16x512xf32> to vector<16x512xbf16>
    %195 = tpu.concatenate %128, %136, %147, %155, %156, %164, %175, %183, %194 in 0 : vector<16x512xbf16>, vector<16x512xbf16>, vector<16x512xbf16>, vector<16x512xbf16>, vector<16x512xbf16>, vector<16x512xbf16>, vector<16x512xbf16>, vector<16x512xbf16>, vector<16x512xbf16> -> vector<144x512xbf16>
    %c0_54 = arith.constant 0 : index
    %c0_55 = arith.constant 0 : index
    %196 = vector.load %arg4[%c0_54, %c0_55] : memref<8x144xbf16, #tpu.memory_space<vmem>>, vector<8x144xbf16>
    %cst_56 = arith.constant dense<0.000000e+00> : vector<8x512xf32>
    %197 = tpu.matmul %196, %195, %cst_56 {dimension_numbers = #tpu.dot_dimension_numbers<[1], [0], [0], [1], [0, 0, 1, 1], [], []>} : vector<8x144xbf16>, vector<144x512xbf16>, vector<8x512xf32> -> vector<8x512xf32>
    %198 = vector.broadcast %5 : vector<8x1xf32> to vector<8x512xf32>
    %199 = arith.addf %197, %198 : vector<8x512xf32>
    %c0_57 = arith.constant 0 : index
    %c0_58 = arith.constant 0 : index
    %200 = vector.load %arg7[%c0_57, %c0_58] : memref<8x512xf32, #tpu.memory_space<vmem>>, vector<8x512xf32>
    tpu.vector_store %arg7[%c0_57, %c0_58], %199 {strides = array<i32>} : memref<8x512xf32, #tpu.memory_space<vmem>>, vector<8x512xf32>,
    return
  }
  func.func @transform_0(%arg0: i32) -> (i32, i32) {
    %c0_i32 = arith.constant 0 : i32
    %c0_i32_0 = arith.constant 0 : i32
    return %c0_i32, %arg0 : i32, i32
  }
  func.func @transform_1(%arg0: i32) -> (i32, i32) {
    %c0_i32 = arith.constant 0 : i32
    %c0_i32_0 = arith.constant 0 : i32
    return %c0_i32, %arg0 : i32, i32
  }
  func.func @transform_2(%arg0: i32) -> (i32, i32) {
    %c0_i32 = arith.constant 0 : i32
    %c0_i32_0 = arith.constant 0 : i32
    %c0_i32_1 = arith.constant 0 : i32
    return %c0_i32, %c0_i32_0 : i32, i32
  }
  func.func @transform_3(%arg0: i32) -> (i32, i32) {
    %c0_i32 = arith.constant 0 : i32
    %c0_i32_0 = arith.constant 0 : i32
    %c0_i32_1 = arith.constant 0 : i32
    return %c0_i32, %c0_i32_0 : i32, i32
  }
  func.func @transform_4(%arg0: i32) -> (i32, i32) {
    %c0_i32 = arith.constant 0 : i32
    %c0_i32_0 = arith.constant 0 : i32
    %c0_i32_1 = arith.constant 0 : i32
    return %c0_i32, %c0_i32_0 : i32, i32
  }
  func.func @transform_5(%arg0: i32) -> (i32, i32) {
    %c0_i32 = arith.constant 0 : i32
    %c0_i32_0 = arith.constant 0 : i32
    %c0_i32_1 = arith.constant 0 : i32
    return %c0_i32, %c0_i32_0 : i32, i32
  }
  func.func @transform_6(%arg0: i32) -> (i32, i32) {
    %c0_i32 = arith.constant 0 : i32
    %c0_i32_0 = arith.constant 0 : i32
    return %c0_i32, %arg0 : i32, i32
  }
}

</mosaic_0001>

<llo_original>
// kernel: tpu_custom_call.1
$region0: #{tpu_custom_call.1}
  #allocation0 [shape = 'u32[]', space=smem, size = 0x4, offset = 0x4, fixed_abs, tag = 'smem constant byte address 0x4 - core index']
  #allocation1 [shape = 'u32[72,128]{1,0:T(1,128)}', space=vmem, size = 0x9000, scoped, tag = 'internal scratch']
  %s0 = inlined_call_operand.hbm [shape: f32[8,1024], index: 0, kind: input, shape index: {}]
  %s1 = inlined_call_operand.hbm [shape: bf16[16,1024], index: 1, kind: input, shape index: {}]
  %s2 = inlined_call_operand.hbm [shape: bf16[8,16], index: 2, kind: input, shape index: {}]
  %s3 = inlined_call_operand.hbm [shape: bf16[8,144], index: 3, kind: input, shape index: {}]
  %s4 = inlined_call_operand.hbm [shape: f32[16,13], index: 4, kind: input, shape index: {}]
  %s5 = inlined_call_operand.vmem [shape: f32[1,4], index: 5, kind: input, shape index: {}]
  %s6 = inlined_call_operand.hbm [shape: f32[8,1024], index: 6, kind: output, shape index: {}]
  %s7 = sld [smem:[#allocation0]]
  $region77: #{tpu_custom_call.1} parent=0
    _
  %s9 = ssub.s32 1, %s7
  %s10 = scalar_select 0, %s9, %s7
  $region1: #{tpu_custom_call.1} parent=0
    #allocation2 [shape = 'u8[32768]{0}', space=vmem, size = 0x8000, scoped, tag = 'input window, operand 0']
    #allocation3 [shape = 's32[2]{0}', space=sflag, size = 0x8, scoped, tag = 'scoped memory for tpu_custom_call.1']
    #allocation4 [shape = 's32[2]{0}', space=sflag, size = 0x8, scoped, tag = 'scoped memory for tpu_custom_call.1']
    #allocation5 [shape = 'u8[32768]{0}', space=vmem, size = 0x8000, scoped, tag = 'input window, operand 1']
    #allocation6 [shape = 's32[2]{0}', space=sflag, size = 0x8, scoped, tag = 'scoped memory for tpu_custom_call.1']
    #allocation7 [shape = 'u8[2048]{0}', space=vmem, size = 0x800, scoped, tag = 'input window, operand 2, single buffered']
    #allocation8 [shape = 'u8[4096]{0}', space=vmem, size = 0x1000, scoped, tag = 'input window, operand 3, single buffered']
    #allocation9 [shape = 's32[1]{0}', space=sflag, size = 0x4, scoped, tag = 'scoped memory for tpu_custom_call.1']
    #allocation10 [shape = 'u8[8192]{0}', space=vmem, size = 0x2000, scoped, tag = 'input window, operand 4, single buffered']
    #allocation11 [shape = 'u8[32768]{0}', space=vmem, size = 0x8000, scoped, tag = 'output window, operand 0']
    %11 = vsyncpa [#allocation3], 0
    %s12 = scalar_lea.sflag [#allocation3], 1
    %13 = vsyncpa %s12, 0
    %14 = vsyncpa [#allocation6], 0
    %s15 = scalar_lea.sflag [#allocation6], 1
    %16 = vsyncpa %s15, 0
    %17 = vsyncpa [#allocation9], 0
    %18 = vsyncpa [#allocation4], 0
    %s19 = scalar_lea.sflag [#allocation4], 1
    %20 = vsyncpa %s19, 0
    loop: start=0, step=1, limit=4
    $region2: #{tpu_custom_call.1} parent=1 // loop_pre_header
      _
    $region3: #{tpu_custom_call.1} parent=1 // loop_header
      %s22 = sphi 0, %s26
      %p23 = scmp.ge.s32.totalorder %s22, 4
      %s32 = sphi 0, %s34
      %s35 = sphi 0, %s32
      %s36 = sphi 0, %s35
      %s52 = sphi 0, %s36
      %s58 = sphi 0, %s60
      %s61 = sphi 0, %s58
      %s62 = sphi 0, %s61
      %s78 = sphi 0, %s62
      %s82 = sphi 0, %s82
      %s84 = sphi 0, %s82
      %s85 = sphi 0, %s84
      %s99 = sphi 0, %s85
      %s103 = sphi 0, %s103
      %s105 = sphi 0, %s103
      %s106 = sphi 0, %s105
      %s120 = sphi 0, %s106
      %s124 = sphi 0, %s124
      %s126 = sphi 0, %s124
      %s127 = sphi 0, %s126
      %s141 = sphi 0, %s127
      %s145 = sphi 0, %s145
      %s147 = sphi 0, %s145
      %s148 = sphi 0, %s147
      %s162 = sphi 0, %s148
      %s168 = sphi 0, %s170
      %s171 = sphi 0, %s168
      %s172 = sphi 0, %s171
      %s188 = sphi 0, %s172
    $region4: #{tpu_custom_call.1} parent=1 // loop_header_branch
      %25 = sbr.rel (%p23) target = $region8
    $region5: #{tpu_custom_call.1} parent=1 // loop_body
      %s27 = ssub.s32 %s22, 1
      %s28 = ssub.s32 %s22, 2
      %s29 = sadd.s32 %s22, 1
      %s30 = ssub.s32 %s22, %s29
      %p31 = scmp.eq.s32.totalorder %s30, 0
      %s33 = sadd.s32 %s32, 1
      %s34 = scalar_select %p31, %s32, %s33
      %p37 = pneg %p31
      %p38 = scmp.eq.s32.totalorder %s22, 1
      %p39 = por %p37, %p38
      %p40 = scmp.ne.s32.totalorder %s32, %s35
      %p41 = scmp.eq.s32.totalorder %s22, 0
      %p42 = por %p40, %p41
      %p43 = scmp.ne.s32.totalorder %s32, %s35
      %p44 = scmp.eq.s32.totalorder %s27, 1
      %p45 = por %p43, %p44
      %p46 = scmp.ne.s32.totalorder %s35, %s36
      %p47 = scmp.eq.s32.totalorder %s27, 0
      %p48 = por %p46, %p47
      %p49 = scmp.ne.s32.totalorder %s35, %s36
      %p50 = scmp.eq.s32.totalorder %s28, 1
      %p51 = por %p49, %p50
      %p53 = scmp.ne.s32.totalorder %s36, %s52
      %p54 = scmp.eq.s32.totalorder %s28, 0
      %p55 = por %p53, %p54
      %s56 = ssub.s32 %s22, %s29
      %p57 = scmp.eq.s32.totalorder %s56, 0
      %s59 = sadd.s32 %s58, 1
      %s60 = scalar_select %p57, %s58, %s59
      %p63 = pneg %p57
      %p64 = scmp.eq.s32.totalorder %s22, 1
      %p65 = por %p63, %p64
      %p66 = scmp.ne.s32.totalorder %s58, %s61
      %p67 = scmp.eq.s32.totalorder %s22, 0
      %p68 = por %p66, %p67
      %p69 = scmp.ne.s32.totalorder %s58, %s61
      %p70 = scmp.eq.s32.totalorder %s27, 1
      %p71 = por %p69, %p70
      %p72 = scmp.ne.s32.totalorder %s61, %s62
      %p73 = scmp.eq.s32.totalorder %s27, 0
      %p74 = por %p72, %p73
      %p75 = scmp.ne.s32.totalorder %s61, %s62
      %p76 = scmp.eq.s32.totalorder %s28, 1
      %p77 = por %p75, %p76
      %p79 = scmp.ne.s32.totalorder %s62, %s78
      %p80 = scmp.eq.s32.totalorder %s28, 0
      %p81 = por %p79, %p80
      %s83 = sadd.s32 %s82, 1
      %p86 = scmp.eq.s32.totalorder %s22, 1
      %p87 = scmp.ne.s32.totalorder %s82, %s84
      %p88 = scmp.eq.s32.totalorder %s22, 0
      %p89 = por %p87, %p88
      %p90 = scmp.ne.s32.totalorder %s82, %s84
      %p91 = scmp.eq.s32.totalorder %s27, 1
      %p92 = por %p90, %p91
      %p93 = scmp.ne.s32.totalorder %s84, %s85
      %p94 = scmp.eq.s32.totalorder %s27, 0
      %p95 = por %p93, %p94
      %p96 = scmp.ne.s32.totalorder %s84, %s85
      %p97 = scmp.eq.s32.totalorder %s28, 1
      %p98 = por %p96, %p97
      %p100 = scmp.ne.s32.totalorder %s85, %s99
      %p101 = scmp.eq.s32.totalorder %s28, 0
      %p102 = por %p100, %p101
      %s104 = sadd.s32 %s103, 1
      %p107 = scmp.eq.s32.totalorder %s22, 1
      %p108 = scmp.ne.s32.totalorder %s103, %s105
      %p109 = scmp.eq.s32.totalorder %s22, 0
      %p110 = por %p108, %p109
      %p111 = scmp.ne.s32.totalorder %s103, %s105
      %p112 = scmp.eq.s32.totalorder %s27, 1
      %p113 = por %p111, %p112
      %p114 = scmp.ne.s32.totalorder %s105, %s106
      %p115 = scmp.eq.s32.totalorder %s27, 0
      %p116 = por %p114, %p115
      %p117 = scmp.ne.s32.totalorder %s105, %s106
      %p118 = scmp.eq.s32.totalorder %s28, 1
      %p119 = por %p117, %p118
      %p121 = scmp.ne.s32.totalorder %s106, %s120
      %p122 = scmp.eq.s32.totalorder %s28, 0
      %p123 = por %p121, %p122
      %s125 = sadd.s32 %s124, 1
      %p128 = scmp.eq.s32.totalorder %s22, 1
      %p129 = scmp.ne.s32.totalorder %s124, %s126
      %p130 = scmp.eq.s32.totalorder %s22, 0
      %p131 = por %p129, %p130
      %p132 = scmp.ne.s32.totalorder %s124, %s126
      %p133 = scmp.eq.s32.totalorder %s27, 1
      %p134 = por %p132, %p133
      %p135 = scmp.ne.s32.totalorder %s126, %s127
      %p136 = scmp.eq.s32.totalorder %s27, 0
      %p137 = por %p135, %p136
      %p138 = scmp.ne.s32.totalorder %s126, %s127
      %p139 = scmp.eq.s32.totalorder %s28, 1
      %p140 = por %p138, %p139
      %p142 = scmp.ne.s32.totalorder %s127, %s141
      %p143 = scmp.eq.s32.totalorder %s28, 0
      %p144 = por %p142, %p143
      %s146 = sadd.s32 %s145, 1
      %p149 = scmp.eq.s32.totalorder %s22, 1
      %p150 = scmp.ne.s32.totalorder %s145, %s147
      %p151 = scmp.eq.s32.totalorder %s22, 0
      %p152 = por %p150, %p151
      %p153 = scmp.ne.s32.totalorder %s145, %s147
      %p154 = scmp.eq.s32.totalorder %s27, 1
      %p155 = por %p153, %p154
      %p156 = scmp.ne.s32.totalorder %s147, %s148
      %p157 = scmp.eq.s32.totalorder %s27, 0
      %p158 = por %p156, %p157
      %p159 = scmp.ne.s32.totalorder %s147, %s148
      %p160 = scmp.eq.s32.totalorder %s28, 1
      %p161 = por %p159, %p160
      %p163 = scmp.ne.s32.totalorder %s148, %s162
      %p164 = scmp.eq.s32.totalorder %s28, 0
      %p165 = por %p163, %p164
      %s166 = ssub.s32 %s22, %s29
      %p167 = scmp.eq.s32.totalorder %s166, 0
      %s169 = sadd.s32 %s168, 1
      %s170 = scalar_select %p167, %s168, %s169
      %p173 = pneg %p167
      %p174 = scmp.eq.s32.totalorder %s22, 1
      %p175 = por %p173, %p174
      %p176 = scmp.ne.s32.totalorder %s168, %s171
      %p177 = scmp.eq.s32.totalorder %s22, 0
      %p178 = por %p176, %p177
      %p179 = scmp.ne.s32.totalorder %s168, %s171
      %p180 = scmp.eq.s32.totalorder %s27, 1
      %p181 = por %p179, %p180
      %p182 = scmp.ne.s32.totalorder %s171, %s172
      %p183 = scmp.eq.s32.totalorder %s27, 0
      %p184 = por %p182, %p183
      %p185 = scmp.ne.s32.totalorder %s171, %s172
      %p186 = scmp.eq.s32.totalorder %s28, 1
      %p187 = por %p185, %p186
      %p189 = scmp.ne.s32.totalorder %s172, %s188
      %p190 = scmp.eq.s32.totalorder %s28, 0
      %p191 = por %p189, %p190
      %p192 = scmp.le.s32.totalorder 1, %s22
      %p193 = scmp.lt.s32.totalorder %s22, 3
      %p194 = pnand %p192, %p193
      %p195 = pneg %p194
      // Predicated region
      $region9: #{tpu_custom_call.1} parent=5 // pred_check
        _
      $region10: #{tpu_custom_call.1} parent=5 // pred_check_branch
        %197 = sbr.rel (%p194) target = $region12
      $region11: #{tpu_custom_call.1} parent=5 // pred_region
        %s198 = ssub.s32 %s22, 1
        // Predicated region
        $region13: #{tpu_custom_call.1} parent=11 // pred_check
          %p199 = pneg %p95
        $region14: #{tpu_custom_call.1} parent=11 // pred_check_branch
          %201 = sbr.rel (%p199) target = $region16
        $region15: #{tpu_custom_call.1} parent=11 // pred_region
          %203 = vsyncadd [#allocation6], 0
          %s205 = sshll.u32 %s2, 4
          %s206 = int_to_ptr.hbm [resolvable:$true] %s205
          %s207 = sshll.u32 [#allocation7], 4
          %s208 = int_to_ptr.vmem [resolvable:$true] %s207
          %210 = dma.hbm_to_vmem [thread:$0]  %s206, 64, %s208, [#allocation6]
        $region16: #{tpu_custom_call.1} parent=11 // pred_fallthru
          _
        // Predicated region
        $region17: #{tpu_custom_call.1} parent=11 // pred_check
          %p211 = pneg %p116
        $region18: #{tpu_custom_call.1} parent=11 // pred_check_branch
          %213 = sbr.rel (%p211) target = $region20
        $region19: #{tpu_custom_call.1} parent=11 // pred_region
          %215 = vsyncadd [#allocation9], 0
          %s217 = sshll.u32 %s3, 4
          %s218 = int_to_ptr.hbm [resolvable:$true] %s217
          %s219 = sshll.u32 [#allocation8], 4
          %s220 = int_to_ptr.vmem [resolvable:$true] %s219
          %222 = dma.hbm_to_vmem [thread:$0]  %s218, 128, %s220, [#allocation9]
        $region20: #{tpu_custom_call.1} parent=11 // pred_fallthru
          _
        // Predicated region
        $region21: #{tpu_custom_call.1} parent=11 // pred_check
          %p223 = pneg %p137
        $region22: #{tpu_custom_call.1} parent=11 // pred_check_branch
          %225 = sbr.rel (%p223) target = $region24
        $region23: #{tpu_custom_call.1} parent=11 // pred_region
          %227 = vsyncadd [#allocation9], 0
          %s228 = sshll.u32 %s4, 4
          %s229 = int_to_ptr.hbm [resolvable:$true] %s228
          %s230 = sshll.u32 [#allocation10], 4
          %s231 = int_to_ptr.vmem [resolvable:$true] %s230
          %236 = dma.hbm_to_vmem [thread:$0]  %s229, 256, %s231, [#allocation9], 128, 128, 8
        $region24: #{tpu_custom_call.1} parent=11 // pred_fallthru
          _
        // Predicated region
        $region25: #{tpu_custom_call.1} parent=11 // pred_check
          %p237 = pneg %p158
        $region26: #{tpu_custom_call.1} parent=11 // pred_check_branch
          %239 = sbr.rel (%p237) target = $region28
        $region27: #{tpu_custom_call.1} parent=11 // pred_region
          _
        $region28: #{tpu_custom_call.1} parent=11 // pred_fallthru
          _
      $region12: #{tpu_custom_call.1} parent=5 // pred_fallthru
        _
      %p240 = scmp.lt.s32.totalorder %s22, 2
      // Predicated region
      $region29: #{tpu_custom_call.1} parent=5 // pred_check
        %p241 = pneg %p240
      $region30: #{tpu_custom_call.1} parent=5 // pred_check_branch
        %243 = sbr.rel (%p241) target = $region32
      $region31: #{tpu_custom_call.1} parent=5 // pred_region
        // Predicated region
        $region33: #{tpu_custom_call.1} parent=31 // pred_check
          %p244 = pneg %p42
        $region34: #{tpu_custom_call.1} parent=31 // pred_check_branch
          %246 = sbr.rel (%p244) target = $region36
        $region35: #{tpu_custom_call.1} parent=31 // pred_region
          %s247 = sand.u32 %s32, 1
          %s248 = scalar_lea.sflag [#allocation3], %s247
          %s249 = sand.u32 %s32, 1
          %s250 = smul.addr %s249, 32
          %s251 = scalar_lea.vmem [#allocation2], %s250
          %s252 = smul.u32 4, %s22
          %254 = vsyncadd %s248, 0
          %s255 = smul.addr %s252, 8
          %s256 = scalar_lea.hbm %s0, %s255
          %s258 = sshll.u32 %s256, 4
          %s259 = int_to_ptr.hbm [resolvable:$true] %s258
          %s260 = sshll.u32 %s251, 4
          %s261 = int_to_ptr.vmem [resolvable:$true] %s260
          %263 = dma.hbm_to_vmem [thread:$0]  %s259, 512, %s261, %s248
        $region36: #{tpu_custom_call.1} parent=31 // pred_fallthru
          _
        // Predicated region
        $region37: #{tpu_custom_call.1} parent=31 // pred_check
          %p264 = pneg %p68
        $region38: #{tpu_custom_call.1} parent=31 // pred_check_branch
          %266 = sbr.rel (%p264) target = $region40
        $region39: #{tpu_custom_call.1} parent=31 // pred_region
          %s267 = sand.u32 %s22, 1
          %s268 = scalar_lea.sflag [#allocation6], %s267
          %s269 = sand.u32 %s58, 1
          %s270 = smul.addr %s269, 32
          %s271 = scalar_lea.vmem [#allocation5], %s270
          %s272 = smul.u32 4, %s22
          %274 = vsyncadd %s268, 0
          %s275 = smul.addr %s272, 4
          %s276 = scalar_lea.hbm %s1, %s275
          %s277 = sshll.u32 %s276, 4
          %s278 = int_to_ptr.hbm [resolvable:$true] %s277
          %s279 = sshll.u32 %s271, 4
          %s280 = int_to_ptr.vmem [resolvable:$true] %s279
          %285 = dma.hbm_to_vmem [thread:$0]  %s278, 512, %s280, %s268, 512, 256, 16
        $region40: #{tpu_custom_call.1} parent=31 // pred_fallthru
          _
      $region32: #{tpu_custom_call.1} parent=5 // pred_fallthru
        _
      %p286 = scmp.le.s32.totalorder 1, %s22
      %p287 = scmp.lt.s32.totalorder %s22, 3
      %p288 = pnand %p286, %p287
      %p289 = pneg %p288
      // Predicated region
      $region41: #{tpu_custom_call.1} parent=5 // pred_check
        _
      $region42: #{tpu_custom_call.1} parent=5 // pred_check_branch
        %291 = sbr.rel (%p288) target = $region44
      $region43: #{tpu_custom_call.1} parent=5 // pred_region
        %s292 = ssub.s32 %s22, 1
        %s293 = sand.u32 %s35, 1
        %s294 = scalar_lea.sflag [#allocation3], %s293
        %s295 = sand.u32 %s35, 1
        %s296 = smul.addr %s295, 32
        %s297 = scalar_lea.vmem [#allocation2], %s296
        // Predicated region
        $region45: #{tpu_custom_call.1} parent=43 // pred_check
          %p298 = pneg %p48
        $region46: #{tpu_custom_call.1} parent=43 // pred_check_branch
          %300 = sbr.rel (%p298) target = $region48
        $region47: #{tpu_custom_call.1} parent=43 // pred_region
          %302 = dma.done %s294, 512
        $region48: #{tpu_custom_call.1} parent=43 // pred_fallthru
          _
        %s303 = sand.u32 %s27, 1
        %s304 = scalar_lea.sflag [#allocation6], %s303
        %s305 = sand.u32 %s61, 1
        %s306 = smul.addr %s305, 32
        %s307 = scalar_lea.vmem [#allocation5], %s306
        // Predicated region
        $region49: #{tpu_custom_call.1} parent=43 // pred_check
          %p308 = pneg %p74
        $region50: #{tpu_custom_call.1} parent=43 // pred_check_branch
          %310 = sbr.rel (%p308) target = $region52
        $region51: #{tpu_custom_call.1} parent=43 // pred_region
          %312 = dma.done %s304, 512
        $region52: #{tpu_custom_call.1} parent=43 // pred_fallthru
          _
        // Predicated region
        $region53: #{tpu_custom_call.1} parent=43 // pred_check
          %p313 = pneg %p95
        $region54: #{tpu_custom_call.1} parent=43 // pred_check_branch
          %315 = sbr.rel (%p313) target = $region56
        $region55: #{tpu_custom_call.1} parent=43 // pred_region
          %317 = dma.done [#allocation6], 64
        $region56: #{tpu_custom_call.1} parent=43 // pred_fallthru
          _
        // Predicated region
        $region57: #{tpu_custom_call.1} parent=43 // pred_check
          %p318 = pneg %p116
        $region58: #{tpu_custom_call.1} parent=43 // pred_check_branch
          %320 = sbr.rel (%p318) target = $region60
        $region59: #{tpu_custom_call.1} parent=43 // pred_region
          %322 = dma.done [#allocation9], 128
        $region60: #{tpu_custom_call.1} parent=43 // pred_fallthru
          _
        // Predicated region
        $region61: #{tpu_custom_call.1} parent=43 // pred_check
          %p323 = pneg %p137
        $region62: #{tpu_custom_call.1} parent=43 // pred_check_branch
          %325 = sbr.rel (%p323) target = $region64
        $region63: #{tpu_custom_call.1} parent=43 // pred_region
          %327 = dma.done [#allocation9], 256
        $region64: #{tpu_custom_call.1} parent=43 // pred_fallthru
          _
        %s328 = sand.u32 %s35, 1
        %s329 = scalar_lea.sflag [#allocation3], %s328
        %s330 = sand.u32 %s35, 1
        %s331 = smul.addr %s330, 32
        %s332 = scalar_lea.vmem [#allocation2], %s331
        %p333 = pneg %p48
        %p334 = pneg %p45
        %s335 = sand.u32 %s27, 1
        %s336 = scalar_lea.sflag [#allocation6], %s335
        %s337 = sand.u32 %s61, 1
        %s338 = smul.addr %s337, 32
        %s339 = scalar_lea.vmem [#allocation5], %s338
        %p340 = pneg %p74
        %p341 = pneg %p71
        %p342 = pneg %p95
        %p343 = pneg %p92
        %p344 = pneg %p116
        %p345 = pneg %p113
        %p346 = pneg %p137
        %p347 = pneg %p134
        %p348 = pneg %p158
        %p349 = pneg %p155
        %p350 = pneg %p184
        %p351 = pneg %p181
        %s352 = sand.u32 %s171, 1
        %s353 = scalar_lea.sflag [#allocation4], %s352
        %s354 = sand.u32 %s171, 1
        %s355 = smul.addr %s354, 32
        %s356 = scalar_lea.vmem [#allocation11], %s355
        %s357 = smul.u32 4, %s27
        %s358 = smul.u32 4, %s27
        %s359 = smul.u32 4, %s27
        %v361 = vld [vmem:[#allocation10] sm:$0xff]
        %v362 = vld [vmem:[#allocation10 + $0x8] sm:$0xff]
        %v363 = vld [vmem:[%s5] sm:$0x1]
        %v364 = vld [vmem:[#allocation7] sm:$0xf]
        %v365 = vld [vmem:[%s307] sm:$0xff]
        %v366 = vld [vmem:[%s307 + $0x8] sm:$0xff]
        %v367 = vld [vmem:[%s307 + $0x10] sm:$0xff]
        %v368 = vld [vmem:[%s307 + $0x18] sm:$0xff]
        %370 = vset.pattern.permute.xlu0 3
        %371 = vperm.xlu0 %370, %v361
        %v372 = vpop.permute.xlu0 %371
        %v378 = vunpack.c.l.b16 %v365
        %v379 = vunpack.c.h.b16 %v365
        %v380 = vunpack.c.l.b16 %v366
        %v381 = vunpack.c.h.b16 %v366
        %v382 = vunpack.c.l.b16 %v367
        %v383 = vunpack.c.h.b16 %v367
        %v384 = vunpack.c.l.b16 %v368
        %v385 = vunpack.c.h.b16 %v368
        %v386 = vpack.c.b16 %v382, %v378
        %v387 = vpack.c.b16 %v383, %v379
        %v388 = vpack.c.b16 %v384, %v380
        %v389 = vpack.c.b16 %v385, %v381
        %vm394 = vcmask 130048
        %v396 = vsel %vm394, %v364, 0
        %398 = vmatpush.bf16.msra.mxu0 0
        %399 = vmatpush.bf16.msra.mxu0 0
        %400 = vmatpush.bf16.msra.mxu0 0
        %401 = vmatpush.bf16.msra.mxu0 0
        %402 = vmatpush.bf16.msra.mxu0 0
        %403 = vmatpush.bf16.msra.mxu0 0
        %404 = vmatpush.bf16.msra.mxu0 0
        %405 = vmatpush.bf16.msra.mxu0 %v386
        %406 = vmatmul.bf16.gmra.mxu0 %v396
        %v407 = vpop.f32.mrf.mxu0
        %v408 = vadd.f32 %v372, %v407
        %v409 = vpop.f32.mrf.mxu0
        %410 = vdwg.mxu0
        %411 = vmatpush.bf16.msra.mxu0 0
        %412 = vmatpush.bf16.msra.mxu0 0
        %413 = vmatpush.bf16.msra.mxu0 0
        %414 = vmatpush.bf16.msra.mxu0 0
        %415 = vmatpush.bf16.msra.mxu0 0
        %416 = vmatpush.bf16.msra.mxu0 0
        %417 = vmatpush.bf16.msra.mxu0 0
        %418 = vmatpush.bf16.msra.mxu0 %v387
        %419 = vmatmul.bf16.gmra.mxu0 %v396
        %v420 = vpop.f32.mrf.mxu0
        %v421 = vadd.f32 %v372, %v420
        %v422 = vpop.f32.mrf.mxu0
        %423 = vdwg.mxu0
        %424 = vmatpush.bf16.msra.mxu0 0
        %425 = vmatpush.bf16.msra.mxu0 0
        %426 = vmatpush.bf16.msra.mxu0 0
        %427 = vmatpush.bf16.msra.mxu0 0
        %428 = vmatpush.bf16.msra.mxu0 0
        %429 = vmatpush.bf16.msra.mxu0 0
        %430 = vmatpush.bf16.msra.mxu0 0
        %431 = vmatpush.bf16.msra.mxu0 %v388
        %432 = vmatmul.bf16.gmra.mxu0 %v396
        %v433 = vpop.f32.mrf.mxu0
        %v434 = vadd.f32 %v372, %v433
        %v435 = vpop.f32.mrf.mxu0
        %436 = vdwg.mxu0
        %437 = vmatpush.bf16.msra.mxu0 0
        %438 = vmatpush.bf16.msra.mxu0 0
        %439 = vmatpush.bf16.msra.mxu0 0
        %440 = vmatpush.bf16.msra.mxu0 0
        %441 = vmatpush.bf16.msra.mxu0 0
        %442 = vmatpush.bf16.msra.mxu0 0
        %443 = vmatpush.bf16.msra.mxu0 0
        %444 = vmatpush.bf16.msra.mxu0 %v389
        %445 = vmatmul.bf16.gmra.mxu0 %v396
        %v446 = vpop.f32.mrf.mxu0
        %v447 = vadd.f32 %v372, %v446
        %v448 = vpop.f32.mrf.mxu0
        %449 = vdwg.mxu0
        %v450 = vld [vmem:[%s297] sm:$0xff]
        %v451 = vld [vmem:[%s297 + $0x8] sm:$0xff]
        %v452 = vld [vmem:[%s297 + $0x10] sm:$0xff]
        %v453 = vld [vmem:[%s297 + $0x18] sm:$0xff]
        %v454 = vadd.f32 %v450, %v408
        %v455 = vrot.slane %v454, 4
        %v456 = vadd.f32 %v454, %v455
        %v457 = vrot.slane %v456, 2
        %v458 = vadd.f32 %v456, %v457
        %v459 = vrot.slane %v458, 1
        %v460 = vadd.f32 %v458, %v459
        %v461 = vadd.f32 %v451, %v421
        %v462 = vrot.slane %v461, 4
        %v463 = vadd.f32 %v461, %v462
        %v464 = vrot.slane %v463, 2
        %v465 = vadd.f32 %v463, %v464
        %v466 = vrot.slane %v465, 1
        %v467 = vadd.f32 %v465, %v466
        %v468 = vadd.f32 %v452, %v434
        %v469 = vrot.slane %v468, 4
        %v470 = vadd.f32 %v468, %v469
        %v471 = vrot.slane %v470, 2
        %v472 = vadd.f32 %v470, %v471
        %v473 = vrot.slane %v472, 1
        %v474 = vadd.f32 %v472, %v473
        %v475 = vadd.f32 %v453, %v447
        %v476 = vrot.slane %v475, 4
        %v477 = vadd.f32 %v475, %v476
        %v478 = vrot.slane %v477, 2
        %v479 = vadd.f32 %v477, %v478
        %v480 = vrot.slane %v479, 1
        %v481 = vadd.f32 %v479, %v480
        %v482 = vrcp.pop 16.0
        %v483 = vmul.f32 16.0, %v482
        %v484 = vsub.f32 1.0, %v483
        %v485 = vmul.f32 %v482, %v484
        %v486 = vadd.f32 %v482, %v485
        %vm487 = vweird.f32 %v482
        %v488 = vsel %vm487, %v482, %v486
        %v489 = vmul.f32 %v460, %v488
        %v490 = vmul.f32 %v467, %v488
        %v491 = vmul.f32 %v474, %v488
        %v492 = vmul.f32 %v481, %v488
        %v493 = vsub.f32 %v450, %v489
        %v494 = vsub.f32 %v451, %v490
        %v495 = vsub.f32 %v452, %v491
        %v496 = vsub.f32 %v453, %v492
        %v497 = vsub.f32 %v408, %v489
        %v498 = vsub.f32 %v421, %v490
        %v499 = vsub.f32 %v434, %v491
        %v500 = vsub.f32 %v447, %v492
        %v501 = vmul.f32 %v493, %v493
        %v502 = vmul.f32 %v494, %v494
        %v503 = vmul.f32 %v495, %v495
        %v504 = vmul.f32 %v496, %v496
        %v505 = vmul.f32 %v497, %v497
        %v506 = vmul.f32 %v498, %v498
        %v507 = vmul.f32 %v499, %v499
        %v508 = vmul.f32 %v500, %v500
        %v509 = vadd.f32 %v501, %v505
        %v510 = vrot.slane %v509, 4
        %v511 = vadd.f32 %v509, %v510
        %v512 = vrot.slane %v511, 2
        %v513 = vadd.f32 %v511, %v512
        %v514 = vrot.slane %v513, 1
        %v515 = vadd.f32 %v513, %v514
        %v516 = vadd.f32 %v502, %v506
        %v517 = vrot.slane %v516, 4
        %v518 = vadd.f32 %v516, %v517
        %v519 = vrot.slane %v518, 2
        %v520 = vadd.f32 %v518, %v519
        %v521 = vrot.slane %v520, 1
        %v522 = vadd.f32 %v520, %v521
        %v523 = vadd.f32 %v503, %v507
        %v524 = vrot.slane %v523, 4
        %v525 = vadd.f32 %v523, %v524
        %v526 = vrot.slane %v525, 2
        %v527 = vadd.f32 %v525, %v526
        %v528 = vrot.slane %v527, 1
        %v529 = vadd.f32 %v527, %v528
        %v530 = vadd.f32 %v504, %v508
        %v531 = vrot.slane %v530, 4
        %v532 = vadd.f32 %v530, %v531
        %v533 = vrot.slane %v532, 2
        %v534 = vadd.f32 %v532, %v533
        %v535 = vrot.slane %v534, 1
        %v536 = vadd.f32 %v534, %v535
        %v537 = vmul.f32 %v515, %v488
        %v538 = vmul.f32 %v522, %v488
        %v539 = vmul.f32 %v529, %v488
        %v540 = vmul.f32 %v536, %v488
        %v541 = vadd.f32 %v537, 1e-06
        %v542 = vadd.f32 %v538, 1e-06
        %v543 = vadd.f32 %v539, 1e-06
        %v544 = vadd.f32 %v540, 1e-06
        %v545 = vrsqrt.pop %v541
        %v546 = vmul.f32 %v545, %v541
        %v547 = vmul.f32 %v546, %v545
        %v548 = vmul.f32 0.5, %v547
        %v549 = vsub.f32 1.5, %v548
        %v550 = vmul.f32 %v545, %v549
        %vm551 = vweird.f32 %v541
        %vm552 = vweird.f32 %v545
        %vm553 = vmor %vm551, %vm552
        %v554 = vsel %vm553, %v545, %v550
        %v555 = vrsqrt.pop %v542
        %v556 = vmul.f32 %v555, %v542
        %v557 = vmul.f32 %v556, %v555
        %v558 = vmul.f32 0.5, %v557
        %v559 = vsub.f32 1.5, %v558
        %v560 = vmul.f32 %v555, %v559
        %vm561 = vweird.f32 %v542
        %vm562 = vweird.f32 %v555
        %vm563 = vmor %vm561, %vm562
        %v564 = vsel %vm563, %v555, %v560
        %v565 = vrsqrt.pop %v543
        %v566 = vmul.f32 %v565, %v543
        %v567 = vmul.f32 %v566, %v565
        %v568 = vmul.f32 0.5, %v567
        %v569 = vsub.f32 1.5, %v568
        %v570 = vmul.f32 %v565, %v569
        %vm571 = vweird.f32 %v543
        %vm572 = vweird.f32 %v565
        %vm573 = vmor %vm571, %vm572
        %v574 = vsel %vm573, %v565, %v570
        %v575 = vrsqrt.pop %v544
        %v576 = vmul.f32 %v575, %v544
        %v577 = vmul.f32 %v576, %v575
        %v578 = vmul.f32 0.5, %v577
        %v579 = vsub.f32 1.5, %v578
        %v580 = vmul.f32 %v575, %v579
        %vm581 = vweird.f32 %v544
        %vm582 = vweird.f32 %v575
        %vm583 = vmor %vm581, %vm582
        %v584 = vsel %vm583, %v575, %v580
        %v585 = vmul.f32 %v493, %v554
        %v586 = vmul.f32 %v494, %v564
        %v587 = vmul.f32 %v495, %v574
        %v588 = vmul.f32 %v496, %v584
        %v589 = vmul.f32 %v497, %v554
        %v590 = vmul.f32 %v498, %v564
        %v591 = vmul.f32 %v499, %v574
        %v592 = vmul.f32 %v500, %v584
        %593 = vset.pattern.permute.xlu0 0
        %594 = vperm.xlu0 %593, %v361
        %v595 = vpop.permute.xlu0 %594
        %598 = vset.pattern.permute.xlu0 0
        %599 = vperm.xlu0 %598, %v362
        %v600 = vpop.permute.xlu0 %599
        %v602 = vmul.f32 %v585, %v595
        %v603 = vmul.f32 %v586, %v595
        %v604 = vmul.f32 %v587, %v595
        %v605 = vmul.f32 %v588, %v595
        %v606 = vmul.f32 %v589, %v600
        %v607 = vmul.f32 %v590, %v600
        %v608 = vmul.f32 %v591, %v600
        %v609 = vmul.f32 %v592, %v600
        %610 = vset.pattern.permute.xlu0 1
        %611 = vperm.xlu0 %610, %v361
        %v612 = vpop.permute.xlu0 %611
        %614 = vset.pattern.permute.xlu0 1
        %615 = vperm.xlu0 %614, %v362
        %v616 = vpop.permute.xlu0 %615
        %v618 = vadd.f32 %v602, %v612
        %v619 = vadd.f32 %v603, %v612
        %v620 = vadd.f32 %v604, %v612
        %v621 = vadd.f32 %v605, %v612
        %v622 = vadd.f32 %v606, %v616
        %v623 = vadd.f32 %v607, %v616
        %v624 = vadd.f32 %v608, %v616
        %v625 = vadd.f32 %v609, %v616
        %v626 = vadd.f32 %v618, %v619
        %627 = vadd.xlane.f32.xlu0 %v626
        %v628 = vpop.xlane.xlu0 %627
        %v629 = vadd.f32 %v622, %v623
        %630 = vadd.xlane.f32.xlu0 %v629
        %v631 = vpop.xlane.xlu0 %630
        %v632 = vrcp.pop 256.0
        %v633 = vmul.f32 256.0, %v632
        %v634 = vsub.f32 1.0, %v633
        %v635 = vmul.f32 %v632, %v634
        %v636 = vadd.f32 %v632, %v635
        %vm637 = vweird.f32 %v632
        %v638 = vsel %vm637, %v632, %v636
        %v639 = vmul.f32 %v628, %v638
        %v640 = vmul.f32 %v631, %v638
        %v641 = vmul.f32 %v361, %v639
        %v642 = vmul.f32 %v362, %v640
        %vm643 = vcmask 72744
        %v644 = vsel %vm643, %v641, 0.0
        %v645 = vsel %vm643, %v642, 0.0
        %v646 = vadd.f32 %v644, %v645
        %v647 = vrot.slane %v646, 4
        %v648 = vadd.f32 %v646, %v647
        %v649 = vrot.slane %v648, 2
        %v650 = vadd.f32 %v648, %v649
        %v651 = vrot.slane %v650, 1
        %v652 = vadd.f32 %v650, %v651
        %v654 = vperm.slane %v363, 0
        %655 = vrot.lane.b32.xlu0 %v654, 5
        %v656 = vpop.permute.xlu0 %655
        %v658 = vadd.f32 %v652, %v656
        %v659 = vmax.f32 %v658, 0.0
        %v660 = vperm.slane %v659, 0
        %662 = vrot.lane.b32.xlu0 %v660, 4
        %v663 = vpop.permute.xlu0 %662
        %v665 = vmul.f32 %v361, %v663
        %v666 = vmul.f32 %v362, %v663
        %669 = vrot.lane.b32.xlu0 %v665, 119
        %v670 = vpop.permute.xlu0 %669
        %671 = vrot.lane.b32.xlu0 %v666, 119
        %v672 = vpop.permute.xlu0 %671
        %vm675 = vcmask 31744
        %v676 = vsel %vm675, %v670, 0.0
        %677 = vadd.xlane.f32.xlu0 %v676
        %v678 = vpop.xlane.xlu0 %677
        %v679 = vsel %vm675, %v672, 0.0
        %680 = vadd.xlane.f32.xlu0 %v679
        %v681 = vpop.xlane.xlu0 %680
        %v682 = vadd.f32 %v678, %v361
        %v683 = vadd.f32 %v681, %v362
        %v684 = vxor.u32 %v682, 2147483648
        %v685 = vxor.u32 %v683, 2147483648
        %v686 = vmul.f32 %v684, 1.442695
        %v687 = vpow.pop %v686
        %v688 = vmul.f32 %v685, 1.442695
        %v689 = vpow.pop %v688
        %v690 = vadd.f32 %v687, 1.0
        %v691 = vadd.f32 %v689, 1.0
        %v692 = vrcp.pop %v690
        %v693 = vmul.f32 %v690, %v692
        %v694 = vsub.f32 1.0, %v693
        %v695 = vmul.f32 %v692, %v694
        %v696 = vadd.f32 %v692, %v695
        %vm697 = vweird.f32 %v690
        %vm698 = vweird.f32 %v692
        %vm699 = vmor %vm697, %vm698
        %v700 = vsel %vm699, %v692, %v696
        %v701 = vand.u32 2147483647, %v690
        %vm702 = vcmp.eq.f32.partialorder %v701, 8.507059e+37
        %v703 = vand.u32 %v690, 2147483648
        %v704 = vor.u32 1.1754944e-38, %v703
        %v705 = vsel %vm702, %v704, %v700
        %v706 = vmul.f32 1.0, %v705
        %v707 = vrcp.pop %v691
        %v708 = vmul.f32 %v691, %v707
        %v709 = vsub.f32 1.0, %v708
        %v710 = vmul.f32 %v707, %v709
        %v711 = vadd.f32 %v707, %v710
        %vm712 = vweird.f32 %v691
        %vm713 = vweird.f32 %v707
        %vm714 = vmor %vm712, %vm713
        %v715 = vsel %vm714, %v707, %v711
        %v716 = vand.u32 2147483647, %v691
        %vm717 = vcmp.eq.f32.partialorder %v716, 8.507059e+37
        %v718 = vand.u32 %v691, 2147483648
        %v719 = vor.u32 1.1754944e-38, %v718
        %v720 = vsel %vm717, %v719, %v715
        %v721 = vmul.f32 1.0, %v720
        %723 = vset.pattern.permute.xlu0 2
        %724 = vperm.xlu0 %723, %v706
        %v725 = vpop.permute.xlu0 %724
        %728 = vset.pattern.permute.xlu0 2
        %729 = vperm.xlu0 %728, %v721
        %v730 = vpop.permute.xlu0 %729
        %v732 = vmul.f32 %v618, %v725
        %v733 = vmul.f32 %v619, %v725
        %v734 = vmul.f32 %v622, %v730
        %v735 = vmul.f32 %v623, %v730
        %v736 = vadd.f32 %v620, %v621
        %737 = vadd.xlane.f32.xlu0 %v736
        %v738 = vpop.xlane.xlu0 %737
        %v739 = vadd.f32 %v624, %v625
        %740 = vadd.xlane.f32.xlu0 %v739
        %v741 = vpop.xlane.xlu0 %740
        %v742 = vmul.f32 %v738, %v638
        %v743 = vmul.f32 %v741, %v638
        %v744 = vmul.f32 %v361, %v742
        %v745 = vmul.f32 %v362, %v743
        %v746 = vsel %vm643, %v744, 0.0
        %v747 = vsel %vm643, %v745, 0.0
        %v748 = vadd.f32 %v746, %v747
        %v749 = vrot.slane %v748, 4
        %v750 = vadd.f32 %v748, %v749
        %v751 = vrot.slane %v750, 2
        %v752 = vadd.f32 %v750, %v751
        %v753 = vrot.slane %v752, 1
        %v754 = vadd.f32 %v752, %v753
        %v755 = vadd.f32 %v754, %v656
        %v756 = vmax.f32 %v755, 0.0
        %v757 = vperm.slane %v756, 0
        %759 = vrot.lane.b32.xlu0 %v757, 4
        %v760 = vpop.permute.xlu0 %759
        %v762 = vmul.f32 %v361, %v760
        %v763 = vmul.f32 %v362, %v760
        %766 = vrot.lane.b32.xlu0 %v762, 119
        %v767 = vpop.permute.xlu0 %766
        %768 = vrot.lane.b32.xlu0 %v763, 119
        %v769 = vpop.permute.xlu0 %768
        %v772 = vsel %vm675, %v767, 0.0
        %773 = vadd.xlane.f32.xlu0 %v772
        %v774 = vpop.xlane.xlu0 %773
        %v775 = vsel %vm675, %v769, 0.0
        %776 = vadd.xlane.f32.xlu0 %v775
        %v777 = vpop.xlane.xlu0 %776
        %v778 = vadd.f32 %v774, %v361
        %v779 = vadd.f32 %v777, %v362
        %v780 = vxor.u32 %v778, 2147483648
        %v781 = vxor.u32 %v779, 2147483648
        %v782 = vmul.f32 %v780, 1.442695
        %v783 = vpow.pop %v782
        %v784 = vmul.f32 %v781, 1.442695
        %v785 = vpow.pop %v784
        %v786 = vadd.f32 %v783, 1.0
        %v787 = vadd.f32 %v785, 1.0
        %v788 = vrcp.pop %v786
        %v789 = vmul.f32 %v786, %v788
        %v790 = vsub.f32 1.0, %v789
        %v791 = vmul.f32 %v788, %v790
        %v792 = vadd.f32 %v788, %v791
        %vm793 = vweird.f32 %v786
        %vm794 = vweird.f32 %v788
        %vm795 = vmor %vm793, %vm794
        %v796 = vsel %vm795, %v788, %v792
        %v797 = vand.u32 2147483647, %v786
        %vm798 = vcmp.eq.f32.partialorder %v797, 8.507059e+37
        %v799 = vand.u32 %v786, 2147483648
        %v800 = vor.u32 1.1754944e-38, %v799
        %v801 = vsel %vm798, %v800, %v796
        %v802 = vmul.f32 1.0, %v801
        %v803 = vrcp.pop %v787
        %v804 = vmul.f32 %v787, %v803
        %v805 = vsub.f32 1.0, %v804
        %v806 = vmul.f32 %v803, %v805
        %v807 = vadd.f32 %v803, %v806
        %vm808 = vweird.f32 %v787
        %vm809 = vweird.f32 %v803
        %vm810 = vmor %vm808, %vm809
        %v811 = vsel %vm810, %v803, %v807
        %v812 = vand.u32 2147483647, %v787
        %vm813 = vcmp.eq.f32.partialorder %v812, 8.507059e+37
        %v814 = vand.u32 %v787, 2147483648
        %v815 = vor.u32 1.1754944e-38, %v814
        %v816 = vsel %vm813, %v815, %v811
        %v817 = vmul.f32 1.0, %v816
        %819 = vset.pattern.permute.xlu0 2
        %820 = vperm.xlu0 %819, %v802
        %v821 = vpop.permute.xlu0 %820
        %824 = vset.pattern.permute.xlu0 2
        %825 = vperm.xlu0 %824, %v817
        %v826 = vpop.permute.xlu0 %825
        %v828 = vmul.f32 %v620, %v821
        %v829 = vmul.f32 %v621, %v821
        %v830 = vmul.f32 %v624, %v826
        %v831 = vmul.f32 %v625, %v826
        %v832 = vlaneseq
        %v833 = vand.u32 %v832, 127
        %v834 = vadd.s32 %v833, 128
        %v835 = vadd.s32 %v833, 256
        %v836 = vadd.s32 %v833, 384
        %vm837 = vcmp.lt.s32.totalorder %v833, 0
        %v838 = vsub.s32 0, %v833
        %v839 = vsel %vm837, %v838, %v833
        %v840 = vshrl.u32 %v839, 8
        %v841 = vand.u32 %v839, 255
        %v842 = vsub.s32 0, %v841
        %v843 = vsel %vm837, %v842, %v841
        %vm844 = vcmp.lt.s32.totalorder %v834, 0
        %v845 = vsub.s32 0, %v834
        %v846 = vsel %vm844, %v845, %v834
        %v847 = vshrl.u32 %v846, 8
        %v848 = vand.u32 %v846, 255
        %v849 = vsub.s32 0, %v848
        %v850 = vsel %vm844, %v849, %v848
        %vm851 = vcmp.lt.s32.totalorder %v835, 0
        %v852 = vsub.s32 0, %v835
        %v853 = vsel %vm851, %v852, %v835
        %v854 = vshrl.u32 %v853, 8
        %v855 = vand.u32 %v853, 255
        %v856 = vsub.s32 0, %v855
        %v857 = vsel %vm851, %v856, %v855
        %vm858 = vcmp.lt.s32.totalorder %v836, 0
        %v859 = vsub.s32 0, %v836
        %v860 = vsel %vm858, %v859, %v836
        %v861 = vshrl.u32 %v860, 8
        %v862 = vand.u32 %v860, 255
        %v863 = vsub.s32 0, %v862
        %v864 = vsel %vm858, %v863, %v862
        %vm865 = vcmp.ne.s32.totalorder %v843, 0
        %vm866 = vcmp.ne.s32.totalorder %v850, 0
        %vm867 = vcmp.ne.s32.totalorder %v857, 0
        %vm868 = vcmp.ne.s32.totalorder %v864, 0
        %vm869 = vcmp.lt.s32.totalorder %v843, 0
        %vm870 = vcmp.lt.s32.totalorder %v850, 0
        %vm871 = vcmp.lt.s32.totalorder %v857, 0
        %vm872 = vcmp.lt.s32.totalorder %v864, 0
        %vm873 = vmand %vm869, %vm865
        %vm874 = vmand %vm870, %vm866
        %vm875 = vmand %vm871, %vm867
        %vm876 = vmand %vm872, %vm868
        %v877 = vadd.s32 %v843, 256
        %v878 = vadd.s32 %v850, 256
        %v879 = vadd.s32 %v857, 256
        %v880 = vadd.s32 %v864, 256
        %v881 = vsel %vm873, %v877, %v843
        %v882 = vsel %vm874, %v878, %v850
        %v883 = vsel %vm875, %v879, %v857
        %v884 = vsel %vm876, %v880, %v864
        %vm885 = vcmp.lt.s32.totalorder %v833, 0
        %v886 = vsub.s32 0, %v833
        %v887 = vsel %vm885, %v886, %v833
        %v888 = vshrl.u32 %v887, 4
        %v889 = vand.u32 %v887, 15
        %v890 = vsub.s32 0, %v889
        %v891 = vsel %vm885, %v890, %v889
        %vm892 = vcmp.lt.s32.totalorder %v834, 0
        %v893 = vsub.s32 0, %v834
        %v894 = vsel %vm892, %v893, %v834
        %v895 = vshrl.u32 %v894, 4
        %v896 = vand.u32 %v894, 15
        %v897 = vsub.s32 0, %v896
        %v898 = vsel %vm892, %v897, %v896
        %vm899 = vcmp.lt.s32.totalorder %v835, 0
        %v900 = vsub.s32 0, %v835
        %v901 = vsel %vm899, %v900, %v835
        %v902 = vshrl.u32 %v901, 4
        %v903 = vand.u32 %v901, 15
        %v904 = vsub.s32 0, %v903
        %v905 = vsel %vm899, %v904, %v903
        %vm906 = vcmp.lt.s32.totalorder %v836, 0
        %v907 = vsub.s32 0, %v836
        %v908 = vsel %vm906, %v907, %v836
        %v909 = vshrl.u32 %v908, 4
        %v910 = vand.u32 %v908, 15
        %v911 = vsub.s32 0, %v910
        %v912 = vsel %vm906, %v911, %v910
        %vm913 = vcmp.ne.s32.totalorder %v891, 0
        %vm914 = vcmp.ne.s32.totalorder %v898, 0
        %vm915 = vcmp.ne.s32.totalorder %v905, 0
        %vm916 = vcmp.ne.s32.totalorder %v912, 0
        %vm917 = vcmp.lt.s32.totalorder %v891, 0
        %vm918 = vcmp.lt.s32.totalorder %v898, 0
        %vm919 = vcmp.lt.s32.totalorder %v905, 0
        %vm920 = vcmp.lt.s32.totalorder %v912, 0
        %vm921 = vmand %vm917, %vm913
        %vm922 = vmand %vm918, %vm914
        %vm923 = vmand %vm919, %vm915
        %vm924 = vmand %vm920, %vm916
        %v925 = vadd.s32 %v891, 16
        %v926 = vadd.s32 %v898, 16
        %v927 = vadd.s32 %v905, 16
        %v928 = vadd.s32 %v912, 16
        %v929 = vsel %vm921, %v925, %v891
        %v930 = vsel %vm922, %v926, %v898
        %v931 = vsel %vm923, %v927, %v905
        %v932 = vsel %vm924, %v928, %v912
        %933 = vrot.lane.b32.xlu0 %v732, 17
        %v934 = vpop.permute.xlu0 %933
        %935 = vrot.lane.b32.xlu0 %v734, 17
        %v936 = vpop.permute.xlu0 %935
        %937 = vrot.lane.b32.xlu0 %v733, 17
        %v938 = vpop.permute.xlu0 %937
        %939 = vrot.lane.b32.xlu0 %v735, 17
        %v940 = vpop.permute.xlu0 %939
        %941 = vrot.lane.b32.xlu0 %v828, 17
        %v942 = vpop.permute.xlu0 %941
        %943 = vrot.lane.b32.xlu0 %v830, 17
        %v944 = vpop.permute.xlu0 %943
        %945 = vrot.lane.b32.xlu0 %v829, 17
        %v946 = vpop.permute.xlu0 %945
        %947 = vrot.lane.b32.xlu0 %v831, 17
        %v948 = vpop.permute.xlu0 %947
        %vm949 = vcmp.lt.s32.totalorder %v833, 17
        %v950 = vsel %vm949, %v942, %v946
        %v951 = vsel %vm949, %v944, %v948
        %v952 = vsel %vm949, %v938, %v942
        %v953 = vsel %vm949, %v940, %v944
        %v954 = vsel %vm949, %v934, %v938
        %v955 = vsel %vm949, %v936, %v940
        %v956 = vsel %vm949, %v946, %v934
        %v957 = vsel %vm949, %v948, %v936
        %vm958 = vcmp.ge.s32.totalorder %v881, 16
        %vm959 = vcmp.ge.s32.totalorder %v882, 16
        %vm960 = vcmp.ge.s32.totalorder %v883, 16
        %vm961 = vcmp.ge.s32.totalorder %v884, 16
        %vm962 = vcmp.ge.s32.totalorder %v929, 1
        %vm963 = vcmp.ge.s32.totalorder %v930, 1
        %vm964 = vcmp.ge.s32.totalorder %v931, 1
        %vm965 = vcmp.ge.s32.totalorder %v932, 1
        %vm966 = vmand %vm958, %vm962
        %vm967 = vmand %vm959, %vm963
        %vm968 = vmand %vm960, %vm964
        %vm969 = vmand %vm961, %vm965
        %v970 = vsel %vm966, 1, 0
        %v971 = vsel %vm967, 1, 0
        %v972 = vsel %vm968, 1, 0
        %v973 = vsel %vm969, 1, 0
        %vm974 = vcmp.eq.s32.totalorder %v970, 1
        %vm975 = vcmp.eq.s32.totalorder %v971, 1
        %vm976 = vcmp.eq.s32.totalorder %v972, 1
        %vm977 = vcmp.eq.s32.totalorder %v973, 1
        %v978 = vsel %vm974, %v956, 0.0
        %v979 = vsel %vm975, %v954, 0.0
        %v980 = vsel %vm976, %v952, 0.0
        %v981 = vsel %vm977, %v950, 0.0
        %v982 = vsel %vm974, %v957, 0.0
        %v983 = vsel %vm975, %v955, 0.0
        %v984 = vsel %vm976, %v953, 0.0
        %v985 = vsel %vm977, %v951, 0.0
        %v986 = vpack.c.bf16 %v979, %v978
        %v987 = vpack.c.bf16 %v981, %v980
        %v988 = vpack.c.bf16 %v983, %v982
        %v989 = vpack.c.bf16 %v985, %v984
        %990 = vrot.lane.b32.xlu0 %v732, 16
        %v991 = vpop.permute.xlu0 %990
        %992 = vrot.lane.b32.xlu0 %v734, 16
        %v993 = vpop.permute.xlu0 %992
        %994 = vrot.lane.b32.xlu0 %v733, 16
        %v995 = vpop.permute.xlu0 %994
        %996 = vrot.lane.b32.xlu0 %v735, 16
        %v997 = vpop.permute.xlu0 %996
        %998 = vrot.lane.b32.xlu0 %v828, 16
        %v999 = vpop.permute.xlu0 %998
        %1000 = vrot.lane.b32.xlu0 %v830, 16
        %v1001 = vpop.permute.xlu0 %1000
        %1002 = vrot.lane.b32.xlu0 %v829, 16
        %v1003 = vpop.permute.xlu0 %1002
        %1004 = vrot.lane.b32.xlu0 %v831, 16
        %v1005 = vpop.permute.xlu0 %1004
        %vm1006 = vcmp.lt.s32.totalorder %v833, 16
        %v1007 = vsel %vm1006, %v999, %v1003
        %v1008 = vsel %vm1006, %v1001, %v1005
        %v1009 = vsel %vm1006, %v995, %v999
        %v1010 = vsel %vm1006, %v997, %v1001
        %v1011 = vsel %vm1006, %v991, %v995
        %v1012 = vsel %vm1006, %v993, %v997
        %v1013 = vsel %vm1006, %v1003, %v991
        %v1014 = vsel %vm1006, %v1005, %v993
        %v1015 = vsel %vm958, 1, 0
        %v1016 = vsel %vm959, 1, 0
        %v1017 = vsel %vm960, 1, 0
        %v1018 = vsel %vm961, 1, 0
        %vm1019 = vcmp.eq.s32.totalorder %v1015, 1
        %vm1020 = vcmp.eq.s32.totalorder %v1016, 1
        %vm1021 = vcmp.eq.s32.totalorder %v1017, 1
        %vm1022 = vcmp.eq.s32.totalorder %v1018, 1
        %v1023 = vsel %vm1019, %v1013, 0.0
        %v1024 = vsel %vm1020, %v1011, 0.0
        %v1025 = vsel %vm1021, %v1009, 0.0
        %v1026 = vsel %vm1022, %v1007, 0.0
        %v1027 = vsel %vm1019, %v1014, 0.0
        %v1028 = vsel %vm1020, %v1012, 0.0
        %v1029 = vsel %vm1021, %v1010, 0.0
        %v1030 = vsel %vm1022, %v1008, 0.0
        %v1031 = vpack.c.bf16 %v1024, %v1023
        %v1032 = vpack.c.bf16 %v1026, %v1025
        %v1033 = vpack.c.bf16 %v1028, %v1027
        %v1034 = vpack.c.bf16 %v1030, %v1029
        %1035 = vrot.lane.b32.xlu0 %v732, 15
        %v1036 = vpop.permute.xlu0 %1035
        %1037 = vrot.lane.b32.xlu0 %v734, 15
        %v1038 = vpop.permute.xlu0 %1037
        %1039 = vrot.lane.b32.xlu0 %v733, 15
        %v1040 = vpop.permute.xlu0 %1039
        %1041 = vrot.lane.b32.xlu0 %v735, 15
        %v1042 = vpop.permute.xlu0 %1041
        %1043 = vrot.lane.b32.xlu0 %v828, 15
        %v1044 = vpop.permute.xlu0 %1043
        %1045 = vrot.lane.b32.xlu0 %v830, 15
        %v1046 = vpop.permute.xlu0 %1045
        %1047 = vrot.lane.b32.xlu0 %v829, 15
        %v1048 = vpop.permute.xlu0 %1047
        %1049 = vrot.lane.b32.xlu0 %v831, 15
        %v1050 = vpop.permute.xlu0 %1049
        %vm1051 = vcmp.lt.s32.totalorder %v833, 15
        %v1052 = vsel %vm1051, %v1044, %v1048
        %v1053 = vsel %vm1051, %v1046, %v1050
        %v1054 = vsel %vm1051, %v1040, %v1044
        %v1055 = vsel %vm1051, %v1042, %v1046
        %v1056 = vsel %vm1051, %v1036, %v1040
        %v1057 = vsel %vm1051, %v1038, %v1042
        %v1058 = vsel %vm1051, %v1048, %v1036
        %v1059 = vsel %vm1051, %v1050, %v1038
        %vm1060 = vcmp.le.s32.totalorder %v929, 14
        %vm1061 = vcmp.le.s32.totalorder %v930, 14
        %vm1062 = vcmp.le.s32.totalorder %v931, 14
        %vm1063 = vcmp.le.s32.totalorder %v932, 14
        %vm1064 = vmand %vm958, %vm1060
        %vm1065 = vmand %vm959, %vm1061
        %vm1066 = vmand %vm960, %vm1062
        %vm1067 = vmand %vm961, %vm1063
        %v1068 = vsel %vm1064, 1, 0
        %v1069 = vsel %vm1065, 1, 0
        %v1070 = vsel %vm1066, 1, 0
        %v1071 = vsel %vm1067, 1, 0
        %vm1072 = vcmp.eq.s32.totalorder %v1068, 1
        %vm1073 = vcmp.eq.s32.totalorder %v1069, 1
        %vm1074 = vcmp.eq.s32.totalorder %v1070, 1
        %vm1075 = vcmp.eq.s32.totalorder %v1071, 1
        %v1076 = vsel %vm1072, %v1058, 0.0
        %v1077 = vsel %vm1073, %v1056, 0.0
        %v1078 = vsel %vm1074, %v1054, 0.0
        %v1079 = vsel %vm1075, %v1052, 0.0
        %v1080 = vsel %vm1072, %v1059, 0.0
        %v1081 = vsel %vm1073, %v1057, 0.0
        %v1082 = vsel %vm1074, %v1055, 0.0
        %v1083 = vsel %vm1075, %v1053, 0.0
        %v1084 = vpack.c.bf16 %v1077, %v1076
        %v1085 = vpack.c.bf16 %v1079, %v1078
        %v1086 = vpack.c.bf16 %v1081, %v1080
        %v1087 = vpack.c.bf16 %v1083, %v1082
        %1088 = vrot.lane.b32.xlu0 %v732, 1
        %v1089 = vpop.permute.xlu0 %1088
        %1090 = vrot.lane.b32.xlu0 %v734, 1
        %v1091 = vpop.permute.xlu0 %1090
        %1092 = vrot.lane.b32.xlu0 %v733, 1
        %v1093 = vpop.permute.xlu0 %1092
        %1094 = vrot.lane.b32.xlu0 %v735, 1
        %v1095 = vpop.permute.xlu0 %1094
        %1096 = vrot.lane.b32.xlu0 %v828, 1
        %v1097 = vpop.permute.xlu0 %1096
        %1098 = vrot.lane.b32.xlu0 %v830, 1
        %v1099 = vpop.permute.xlu0 %1098
        %1100 = vrot.lane.b32.xlu0 %v829, 1
        %v1101 = vpop.permute.xlu0 %1100
        %1102 = vrot.lane.b32.xlu0 %v831, 1
        %v1103 = vpop.permute.xlu0 %1102
        %vm1104 = vcmp.lt.s32.totalorder %v833, 1
        %v1105 = vsel %vm1104, %v1097, %v1101
        %v1106 = vsel %vm1104, %v1099, %v1103
        %v1107 = vsel %vm1104, %v1093, %v1097
        %v1108 = vsel %vm1104, %v1095, %v1099
        %v1109 = vsel %vm1104, %v1089, %v1093
        %v1110 = vsel %vm1104, %v1091, %v1095
        %v1111 = vsel %vm1104, %v1101, %v1089
        %v1112 = vsel %vm1104, %v1103, %v1091
        %v1113 = vsel %vm962, 1, 0
        %v1114 = vsel %vm963, 1, 0
        %v1115 = vsel %vm964, 1, 0
        %v1116 = vsel %vm965, 1, 0
        %vm1117 = vcmp.eq.s32.totalorder %v1113, 1
        %vm1118 = vcmp.eq.s32.totalorder %v1114, 1
        %vm1119 = vcmp.eq.s32.totalorder %v1115, 1
        %vm1120 = vcmp.eq.s32.totalorder %v1116, 1
        %v1121 = vsel %vm1117, %v1111, 0.0
        %v1122 = vsel %vm1118, %v1109, 0.0
        %v1123 = vsel %vm1119, %v1107, 0.0
        %v1124 = vsel %vm1120, %v1105, 0.0
        %v1125 = vsel %vm1117, %v1112, 0.0
        %v1126 = vsel %vm1118, %v1110, 0.0
        %v1127 = vsel %vm1119, %v1108, 0.0
        %v1128 = vsel %vm1120, %v1106, 0.0
        %v1129 = vpack.c.bf16 %v1122, %v1121
        %v1130 = vpack.c.bf16 %v1124, %v1123
        %v1131 = vpack.c.bf16 %v1126, %v1125
        %v1132 = vpack.c.bf16 %v1128, %v1127
        %v1133 = vpack.c.bf16 %v733, %v732
        %v1134 = vpack.c.bf16 %v829, %v828
        %v1135 = vpack.c.bf16 %v735, %v734
        %v1136 = vpack.c.bf16 %v831, %v830
        %1137 = vrot.lane.b32.xlu0 %v732, 127
        %v1138 = vpop.permute.xlu0 %1137
        %1139 = vrot.lane.b32.xlu0 %v734, 127
        %v1140 = vpop.permute.xlu0 %1139
        %1141 = vrot.lane.b32.xlu0 %v733, 127
        %v1142 = vpop.permute.xlu0 %1141
        %1143 = vrot.lane.b32.xlu0 %v735, 127
        %v1144 = vpop.permute.xlu0 %1143
        %1145 = vrot.lane.b32.xlu0 %v828, 127
        %v1146 = vpop.permute.xlu0 %1145
        %1147 = vrot.lane.b32.xlu0 %v830, 127
        %v1148 = vpop.permute.xlu0 %1147
        %1149 = vrot.lane.b32.xlu0 %v829, 127
        %v1150 = vpop.permute.xlu0 %1149
        %1151 = vrot.lane.b32.xlu0 %v831, 127
        %v1152 = vpop.permute.xlu0 %1151
        %vm1153 = vcmp.lt.s32.totalorder %v833, 127
        %v1154 = vsel %vm1153, %v1146, %v1150
        %v1155 = vsel %vm1153, %v1148, %v1152
        %v1156 = vsel %vm1153, %v1142, %v1146
        %v1157 = vsel %vm1153, %v1144, %v1148
        %v1158 = vsel %vm1153, %v1138, %v1142
        %v1159 = vsel %vm1153, %v1140, %v1144
        %v1160 = vsel %vm1153, %v1150, %v1138
        %v1161 = vsel %vm1153, %v1152, %v1140
        %v1162 = vsel %vm1060, 1, 0
        %v1163 = vsel %vm1061, 1, 0
        %v1164 = vsel %vm1062, 1, 0
        %v1165 = vsel %vm1063, 1, 0
        %vm1166 = vcmp.eq.s32.totalorder %v1162, 1
        %vm1167 = vcmp.eq.s32.totalorder %v1163, 1
        %vm1168 = vcmp.eq.s32.totalorder %v1164, 1
        %vm1169 = vcmp.eq.s32.totalorder %v1165, 1
        %v1170 = vsel %vm1166, %v1158, 0.0
        %v1171 = vsel %vm1167, %v1156, 0.0
        %v1172 = vsel %vm1168, %v1154, 0.0
        %v1173 = vsel %vm1169, %v1160, 0.0
        %v1174 = vsel %vm1166, %v1159, 0.0
        %v1175 = vsel %vm1167, %v1157, 0.0
        %v1176 = vsel %vm1168, %v1155, 0.0
        %v1177 = vsel %vm1169, %v1161, 0.0
        %v1178 = vpack.c.bf16 %v1171, %v1170
        %v1179 = vpack.c.bf16 %v1173, %v1172
        %v1180 = vpack.c.bf16 %v1175, %v1174
        %v1181 = vpack.c.bf16 %v1177, %v1176
        %1182 = vrot.lane.b32.xlu0 %v732, 113
        %v1183 = vpop.permute.xlu0 %1182
        %1184 = vrot.lane.b32.xlu0 %v734, 113
        %v1185 = vpop.permute.xlu0 %1184
        %1186 = vrot.lane.b32.xlu0 %v733, 113
        %v1187 = vpop.permute.xlu0 %1186
        %1188 = vrot.lane.b32.xlu0 %v735, 113
        %v1189 = vpop.permute.xlu0 %1188
        %1190 = vrot.lane.b32.xlu0 %v828, 113
        %v1191 = vpop.permute.xlu0 %1190
        %1192 = vrot.lane.b32.xlu0 %v830, 113
        %v1193 = vpop.permute.xlu0 %1192
        %1194 = vrot.lane.b32.xlu0 %v829, 113
        %v1195 = vpop.permute.xlu0 %1194
        %1196 = vrot.lane.b32.xlu0 %v831, 113
        %v1197 = vpop.permute.xlu0 %1196
        %vm1198 = vcmp.lt.s32.totalorder %v833, 113
        %v1199 = vsel %vm1198, %v1191, %v1195
        %v1200 = vsel %vm1198, %v1193, %v1197
        %v1201 = vsel %vm1198, %v1187, %v1191
        %v1202 = vsel %vm1198, %v1189, %v1193
        %v1203 = vsel %vm1198, %v1183, %v1187
        %v1204 = vsel %vm1198, %v1185, %v1189
        %v1205 = vsel %vm1198, %v1195, %v1183
        %v1206 = vsel %vm1198, %v1197, %v1185
        %vm1207 = vcmp.lt.s32.totalorder %v881, 240
        %vm1208 = vcmp.lt.s32.totalorder %v882, 240
        %vm1209 = vcmp.lt.s32.totalorder %v883, 240
        %vm1210 = vcmp.lt.s32.totalorder %v884, 240
        %vm1211 = vmand %vm1207, %vm962
        %vm1212 = vmand %vm1208, %vm963
        %vm1213 = vmand %vm1209, %vm964
        %vm1214 = vmand %vm1210, %vm965
        %v1215 = vsel %vm1211, 1, 0
        %v1216 = vsel %vm1212, 1, 0
        %v1217 = vsel %vm1213, 1, 0
        %v1218 = vsel %vm1214, 1, 0
        %vm1219 = vcmp.eq.s32.totalorder %v1215, 1
        %vm1220 = vcmp.eq.s32.totalorder %v1216, 1
        %vm1221 = vcmp.eq.s32.totalorder %v1217, 1
        %vm1222 = vcmp.eq.s32.totalorder %v1218, 1
        %v1223 = vsel %vm1219, %v1203, 0.0
        %v1224 = vsel %vm1220, %v1201, 0.0
        %v1225 = vsel %vm1221, %v1199, 0.0
        %v1226 = vsel %vm1222, %v1205, 0.0
        %v1227 = vsel %vm1219, %v1204, 0.0
        %v1228 = vsel %vm1220, %v1202, 0.0
        %v1229 = vsel %vm1221, %v1200, 0.0
        %v1230 = vsel %vm1222, %v1206, 0.0
        %v1231 = vpack.c.bf16 %v1224, %v1223
        %v1232 = vpack.c.bf16 %v1226, %v1225
        %v1233 = vpack.c.bf16 %v1228, %v1227
        %v1234 = vpack.c.bf16 %v1230, %v1229
        %1235 = vrot.lane.b32.xlu0 %v732, 112
        %v1236 = vpop.permute.xlu0 %1235
        %1237 = vrot.lane.b32.xlu0 %v734, 112
        %v1238 = vpop.permute.xlu0 %1237
        %1239 = vrot.lane.b32.xlu0 %v733, 112
        %v1240 = vpop.permute.xlu0 %1239
        %1241 = vrot.lane.b32.xlu0 %v735, 112
        %v1242 = vpop.permute.xlu0 %1241
        %1243 = vrot.lane.b32.xlu0 %v828, 112
        %v1244 = vpop.permute.xlu0 %1243
        %1245 = vrot.lane.b32.xlu0 %v830, 112
        %v1246 = vpop.permute.xlu0 %1245
        %1247 = vrot.lane.b32.xlu0 %v829, 112
        %v1248 = vpop.permute.xlu0 %1247
        %1249 = vrot.lane.b32.xlu0 %v831, 112
        %v1250 = vpop.permute.xlu0 %1249
        %vm1251 = vcmp.lt.s32.totalorder %v833, 112
        %v1252 = vsel %vm1251, %v1244, %v1248
        %v1253 = vsel %vm1251, %v1246, %v1250
        %v1254 = vsel %vm1251, %v1240, %v1244
        %v1255 = vsel %vm1251, %v1242, %v1246
        %v1256 = vsel %vm1251, %v1236, %v1240
        %v1257 = vsel %vm1251, %v1238, %v1242
        %v1258 = vsel %vm1251, %v1248, %v1236
        %v1259 = vsel %vm1251, %v1250, %v1238
        %v1260 = vsel %vm1207, 1, 0
        %v1261 = vsel %vm1208, 1, 0
        %v1262 = vsel %vm1209, 1, 0
        %v1263 = vsel %vm1210, 1, 0
        %vm1264 = vcmp.eq.s32.totalorder %v1260, 1
        %vm1265 = vcmp.eq.s32.totalorder %v1261, 1
        %vm1266 = vcmp.eq.s32.totalorder %v1262, 1
        %vm1267 = vcmp.eq.s32.totalorder %v1263, 1
        %v1268 = vsel %vm1264, %v1256, 0.0
        %v1269 = vsel %vm1265, %v1254, 0.0
        %v1270 = vsel %vm1266, %v1252, 0.0
        %v1271 = vsel %vm1267, %v1258, 0.0
        %v1272 = vsel %vm1264, %v1257, 0.0
        %v1273 = vsel %vm1265, %v1255, 0.0
        %v1274 = vsel %vm1266, %v1253, 0.0
        %v1275 = vsel %vm1267, %v1259, 0.0
        %v1276 = vpack.c.bf16 %v1269, %v1268
        %v1277 = vpack.c.bf16 %v1271, %v1270
        %v1278 = vpack.c.bf16 %v1273, %v1272
        %v1279 = vpack.c.bf16 %v1275, %v1274
        %1280 = vrot.lane.b32.xlu0 %v732, 111
        %v1281 = vpop.permute.xlu0 %1280
        %1282 = vrot.lane.b32.xlu0 %v734, 111
        %v1283 = vpop.permute.xlu0 %1282
        %1284 = vrot.lane.b32.xlu0 %v733, 111
        %v1285 = vpop.permute.xlu0 %1284
        %1286 = vrot.lane.b32.xlu0 %v735, 111
        %v1287 = vpop.permute.xlu0 %1286
        %1288 = vrot.lane.b32.xlu0 %v828, 111
        %v1289 = vpop.permute.xlu0 %1288
        %1290 = vrot.lane.b32.xlu0 %v830, 111
        %v1291 = vpop.permute.xlu0 %1290
        %1292 = vrot.lane.b32.xlu0 %v829, 111
        %v1293 = vpop.permute.xlu0 %1292
        %1294 = vrot.lane.b32.xlu0 %v831, 111
        %v1295 = vpop.permute.xlu0 %1294
        %vm1296 = vcmp.lt.s32.totalorder %v833, 111
        %v1297 = vsel %vm1296, %v1289, %v1293
        %v1298 = vsel %vm1296, %v1291, %v1295
        %v1299 = vsel %vm1296, %v1285, %v1289
        %v1300 = vsel %vm1296, %v1287, %v1291
        %v1301 = vsel %vm1296, %v1281, %v1285
        %v1302 = vsel %vm1296, %v1283, %v1287
        %v1303 = vsel %vm1296, %v1293, %v1281
        %v1304 = vsel %vm1296, %v1295, %v1283
        %vm1305 = vmand %vm1207, %vm1060
        %vm1306 = vmand %vm1208, %vm1061
        %vm1307 = vmand %vm1209, %vm1062
        %vm1308 = vmand %vm1210, %vm1063
        %v1309 = vsel %vm1305, 1, 0
        %v1310 = vsel %vm1306, 1, 0
        %v1311 = vsel %vm1307, 1, 0
        %v1312 = vsel %vm1308, 1, 0
        %vm1313 = vcmp.eq.s32.totalorder %v1309, 1
        %vm1314 = vcmp.eq.s32.totalorder %v1310, 1
        %vm1315 = vcmp.eq.s32.totalorder %v1311, 1
        %vm1316 = vcmp.eq.s32.totalorder %v1312, 1
        %v1317 = vsel %vm1313, %v1301, 0.0
        %v1318 = vsel %vm1314, %v1299, 0.0
        %v1319 = vsel %vm1315, %v1297, 0.0
        %v1320 = vsel %vm1316, %v1303, 0.0
        %v1321 = vsel %vm1313, %v1302, 0.0
        %v1322 = vsel %vm1314, %v1300, 0.0
        %v1323 = vsel %vm1315, %v1298, 0.0
        %v1324 = vsel %vm1316, %v1304, 0.0
        %v1325 = vpack.c.bf16 %v1318, %v1317
        %v1326 = vpack.c.bf16 %v1320, %v1319
        %v1327 = vpack.c.bf16 %v1322, %v1321
        %v1328 = vpack.c.bf16 %v1324, %v1323
        %v1333 = vunpack.c.l.b16 %v986
        %v1334 = vunpack.c.h.b16 %v986
        %v1335 = vunpack.c.l.b16 %v987
        %v1336 = vunpack.c.h.b16 %v987
        %v1337 = vunpack.c.l.b16 %v988
        %v1338 = vunpack.c.h.b16 %v988
        %v1339 = vunpack.c.l.b16 %v989
        %v1340 = vunpack.c.h.b16 %v989
        %v1341 = vpack.c.b16 %v1337, %v1333
        %v1342 = vpack.c.b16 %v1338, %v1334
        %v1343 = vpack.c.b16 %v1339, %v1335
        %v1344 = vpack.c.b16 %v1340, %v1336
        %v1353 = vunpack.c.l.b16 %v1031
        %v1354 = vunpack.c.h.b16 %v1031
        %v1355 = vunpack.c.l.b16 %v1032
        %v1356 = vunpack.c.h.b16 %v1032
        %v1357 = vunpack.c.l.b16 %v1033
        %v1358 = vunpack.c.h.b16 %v1033
        %v1359 = vunpack.c.l.b16 %v1034
        %v1360 = vunpack.c.h.b16 %v1034
        %v1361 = vpack.c.b16 %v1357, %v1353
        %v1362 = vpack.c.b16 %v1358, %v1354
        %v1363 = vpack.c.b16 %v1359, %v1355
        %v1364 = vpack.c.b16 %v1360, %v1356
        %v1373 = vunpack.c.l.b16 %v1084
        %v1374 = vunpack.c.h.b16 %v1084
        %v1375 = vunpack.c.l.b16 %v1085
        %v1376 = vunpack.c.h.b16 %v1085
        %v1377 = vunpack.c.l.b16 %v1086
        %v1378 = vunpack.c.h.b16 %v1086
        %v1379 = vunpack.c.l.b16 %v1087
        %v1380 = vunpack.c.h.b16 %v1087
        %v1381 = vpack.c.b16 %v1377, %v1373
        %v1382 = vpack.c.b16 %v1378, %v1374
        %v1383 = vpack.c.b16 %v1379, %v1375
        %v1384 = vpack.c.b16 %v1380, %v1376
        %v1393 = vunpack.c.l.b16 %v1129
        %v1394 = vunpack.c.h.b16 %v1129
        %v1395 = vunpack.c.l.b16 %v1130
        %v1396 = vunpack.c.h.b16 %v1130
        %v1397 = vunpack.c.l.b16 %v1131
        %v1398 = vunpack.c.h.b16 %v1131
        %v1399 = vunpack.c.l.b16 %v1132
        %v1400 = vunpack.c.h.b16 %v1132
        %v1401 = vpack.c.b16 %v1397, %v1393
        %v1402 = vpack.c.b16 %v1398, %v1394
        %v1403 = vpack.c.b16 %v1399, %v1395
        %v1404 = vpack.c.b16 %v1400, %v1396
        %v1413 = vunpack.c.l.b16 %v1133
        %v1414 = vunpack.c.h.b16 %v1133
        %v1415 = vunpack.c.l.b16 %v1134
        %v1416 = vunpack.c.h.b16 %v1134
        %v1417 = vunpack.c.l.b16 %v1135
        %v1418 = vunpack.c.h.b16 %v1135
        %v1419 = vunpack.c.l.b16 %v1136
        %v1420 = vunpack.c.h.b16 %v1136
        %v1421 = vpack.c.b16 %v1417, %v1413
        %v1422 = vpack.c.b16 %v1418, %v1414
        %v1423 = vpack.c.b16 %v1419, %v1415
        %v1424 = vpack.c.b16 %v1420, %v1416
        %v1433 = vunpack.c.l.b16 %v1178
        %v1434 = vunpack.c.h.b16 %v1178
        %v1435 = vunpack.c.l.b16 %v1179
        %v1436 = vunpack.c.h.b16 %v1179
        %v1437 = vunpack.c.l.b16 %v1180
        %v1438 = vunpack.c.h.b16 %v1180
        %v1439 = vunpack.c.l.b16 %v1181
        %v1440 = vunpack.c.h.b16 %v1181
        %v1441 = vpack.c.b16 %v1437, %v1433
        %v1442 = vpack.c.b16 %v1438, %v1434
        %v1443 = vpack.c.b16 %v1439, %v1435
        %v1444 = vpack.c.b16 %v1440, %v1436
        %v1453 = vunpack.c.l.b16 %v1231
        %v1454 = vunpack.c.h.b16 %v1231
        %v1455 = vunpack.c.l.b16 %v1232
        %v1456 = vunpack.c.h.b16 %v1232
        %v1457 = vunpack.c.l.b16 %v1233
        %v1458 = vunpack.c.h.b16 %v1233
        %v1459 = vunpack.c.l.b16 %v1234
        %v1460 = vunpack.c.h.b16 %v1234
        %v1461 = vpack.c.b16 %v1457, %v1453
        %v1462 = vpack.c.b16 %v1458, %v1454
        %v1463 = vpack.c.b16 %v1459, %v1455
        %v1464 = vpack.c.b16 %v1460, %v1456
        %v1473 = vunpack.c.l.b16 %v1276
        %v1474 = vunpack.c.h.b16 %v1276
        %v1475 = vunpack.c.l.b16 %v1277
        %v1476 = vunpack.c.h.b16 %v1277
        %v1477 = vunpack.c.l.b16 %v1278
        %v1478 = vunpack.c.h.b16 %v1278
        %v1479 = vunpack.c.l.b16 %v1279
        %v1480 = vunpack.c.h.b16 %v1279
        %v1481 = vpack.c.b16 %v1477, %v1473
        %v1482 = vpack.c.b16 %v1478, %v1474
        %v1483 = vpack.c.b16 %v1479, %v1475
        %v1484 = vpack.c.b16 %v1480, %v1476
        %v1493 = vunpack.c.l.b16 %v1325
        %v1494 = vunpack.c.h.b16 %v1325
        %v1495 = vunpack.c.l.b16 %v1326
        %v1496 = vunpack.c.h.b16 %v1326
        %v1497 = vunpack.c.l.b16 %v1327
        %v1498 = vunpack.c.h.b16 %v1327
        %v1499 = vunpack.c.l.b16 %v1328
        %v1500 = vunpack.c.h.b16 %v1328
        %v1501 = vpack.c.b16 %v1497, %v1493
        %v1502 = vpack.c.b16 %v1498, %v1494
        %v1503 = vpack.c.b16 %v1499, %v1495
        %v1504 = vpack.c.b16 %v1500, %v1496
        %v1509 = vld [vmem:[#allocation8] sm:$0xff]
        %1510 = vset.pattern.permute.xlu0 4
        %1511 = vperm.xlu0 %1510, %v361
        %v1512 = vpop.permute.xlu0 %1511
        %v1515 = vunpack.c.l.b16 %v1509
        %v1516 = vunpack.c.h.b16 %v1509
        %v1517 = vpack.c.b16 %v1515, %v1515
        %v1518 = vpack.c.b16 %v1516, %v1516
        %v1521 = vsel %vm394, %v1518, 0
        %1523 = vmatpush.bf16.msra.mxu0 %v1481
        %1524 = vmatpush.bf16.msra.mxu0 %v1461
        %1525 = vmatpush.bf16.msra.mxu0 %v1441
        %1526 = vmatpush.bf16.msra.mxu0 %v1421
        %1527 = vmatpush.bf16.msra.mxu0 %v1401
        %1528 = vmatpush.bf16.msra.mxu0 %v1381
        %1529 = vmatpush.bf16.msra.mxu0 %v1361
        %1530 = vmatpush.bf16.msra.mxu0 %v1341
        %1531 = vmatmul.bf16.gmra.mxu0 %v1517
        %v1532 = vpop.f32.mrf.mxu0
        %v1533 = vadd.f32 %v1512, %v1532
        %v1534 = vpop.f32.mrf.mxu0
        %1535 = vdwg.mxu0
        %1536 = vmatpush.bf16.msra.mxu0 0
        %1537 = vmatpush.bf16.msra.mxu0 0
        %1538 = vmatpush.bf16.msra.mxu0 0
        %1539 = vmatpush.bf16.msra.mxu0 0
        %1540 = vmatpush.bf16.msra.mxu0 0
        %1541 = vmatpush.bf16.msra.mxu0 0
        %1542 = vmatpush.bf16.msra.mxu0 0
        %1543 = vmatpush.bf16.msra.mxu0 %v1501
        %1544 = vmatmul.bf16.gmra.mxu0 %v1521
        %v1545 = vpop.f32.mrf.mxu0
        %v1546 = vadd.f32 %v1533, %v1545
        %v1547 = vpop.f32.mrf.mxu0
        %1548 = vdwg.mxu0
        %1549 = vmatpush.bf16.msra.mxu0 %v1482
        %1550 = vmatpush.bf16.msra.mxu0 %v1462
        %1551 = vmatpush.bf16.msra.mxu0 %v1442
        %1552 = vmatpush.bf16.msra.mxu0 %v1422
        %1553 = vmatpush.bf16.msra.mxu0 %v1402
        %1554 = vmatpush.bf16.msra.mxu0 %v1382
        %1555 = vmatpush.bf16.msra.mxu0 %v1362
        %1556 = vmatpush.bf16.msra.mxu0 %v1342
        %1557 = vmatmul.bf16.gmra.mxu0 %v1517
        %v1558 = vpop.f32.mrf.mxu0
        %v1559 = vadd.f32 %v1512, %v1558
        %v1560 = vpop.f32.mrf.mxu0
        %1561 = vdwg.mxu0
        %1562 = vmatpush.bf16.msra.mxu0 0
        %1563 = vmatpush.bf16.msra.mxu0 0
        %1564 = vmatpush.bf16.msra.mxu0 0
        %1565 = vmatpush.bf16.msra.mxu0 0
        %1566 = vmatpush.bf16.msra.mxu0 0
        %1567 = vmatpush.bf16.msra.mxu0 0
        %1568 = vmatpush.bf16.msra.mxu0 0
        %1569 = vmatpush.bf16.msra.mxu0 %v1502
        %1570 = vmatmul.bf16.gmra.mxu0 %v1521
        %v1571 = vpop.f32.mrf.mxu0
        %v1572 = vadd.f32 %v1559, %v1571
        %v1573 = vpop.f32.mrf.mxu0
        %1574 = vdwg.mxu0
        %1575 = vmatpush.bf16.msra.mxu0 %v1483
        %1576 = vmatpush.bf16.msra.mxu0 %v1463
        %1577 = vmatpush.bf16.msra.mxu0 %v1443
        %1578 = vmatpush.bf16.msra.mxu0 %v1423
        %1579 = vmatpush.bf16.msra.mxu0 %v1403
        %1580 = vmatpush.bf16.msra.mxu0 %v1383
        %1581 = vmatpush.bf16.msra.mxu0 %v1363
        %1582 = vmatpush.bf16.msra.mxu0 %v1343
        %1583 = vmatmul.bf16.gmra.mxu0 %v1517
        %v1584 = vpop.f32.mrf.mxu0
        %v1585 = vadd.f32 %v1512, %v1584
        %v1586 = vpop.f32.mrf.mxu0
        %1587 = vdwg.mxu0
        %1588 = vmatpush.bf16.msra.mxu0 0
        %1589 = vmatpush.bf16.msra.mxu0 0
        %1590 = vmatpush.bf16.msra.mxu0 0
        %1591 = vmatpush.bf16.msra.mxu0 0
        %1592 = vmatpush.bf16.msra.mxu0 0
        %1593 = vmatpush.bf16.msra.mxu0 0
        %1594 = vmatpush.bf16.msra.mxu0 0
        %1595 = vmatpush.bf16.msra.mxu0 %v1503
        %1596 = vmatmul.bf16.gmra.mxu0 %v1521
        %v1597 = vpop.f32.mrf.mxu0
        %v1598 = vadd.f32 %v1585, %v1597
        %v1599 = vpop.f32.mrf.mxu0
        %1600 = vdwg.mxu0
        %1601 = vmatpush.bf16.msra.mxu0 %v1484
        %1602 = vmatpush.bf16.msra.mxu0 %v1464
        %1603 = vmatpush.bf16.msra.mxu0 %v1444
        %1604 = vmatpush.bf16.msra.mxu0 %v1424
        %1605 = vmatpush.bf16.msra.mxu0 %v1404
        %1606 = vmatpush.bf16.msra.mxu0 %v1384
        %1607 = vmatpush.bf16.msra.mxu0 %v1364
        %1608 = vmatpush.bf16.msra.mxu0 %v1344
        %1609 = vmatmul.bf16.gmra.mxu0 %v1517
        %v1610 = vpop.f32.mrf.mxu0
        %v1611 = vadd.f32 %v1512, %v1610
        %v1612 = vpop.f32.mrf.mxu0
        %1613 = vdwg.mxu0
        %1614 = vmatpush.bf16.msra.mxu0 0
        %1615 = vmatpush.bf16.msra.mxu0 0
        %1616 = vmatpush.bf16.msra.mxu0 0
        %1617 = vmatpush.bf16.msra.mxu0 0
        %1618 = vmatpush.bf16.msra.mxu0 0
        %1619 = vmatpush.bf16.msra.mxu0 0
        %1620 = vmatpush.bf16.msra.mxu0 0
        %1621 = vmatpush.bf16.msra.mxu0 %v1504
        %1622 = vmatmul.bf16.gmra.mxu0 %v1521
        %v1623 = vpop.f32.mrf.mxu0
        %v1624 = vadd.f32 %v1611, %v1623
        %v1625 = vpop.f32.mrf.mxu0
        %1626 = vdwg.mxu0
        %1627 = vst [vmem:[%s356] sm:$0xff] %v1546
        %1628 = vst [vmem:[%s356 + $0x8] sm:$0xff] %v1572
        %1629 = vst [vmem:[%s356 + $0x10] sm:$0xff] %v1598
        %1630 = vst [vmem:[%s356 + $0x18] sm:$0xff] %v1624
        %s1631 = sand.u32 %s171, 1
        %s1632 = scalar_lea.sflag [#allocation4], %s1631
        %s1633 = sand.u32 %s171, 1
        %s1634 = smul.addr %s1633, 32
        %s1635 = scalar_lea.vmem [#allocation11], %s1634
        // Predicated region
        $region65: #{tpu_custom_call.1} parent=43 // pred_check
          %p1636 = pneg %p181
        $region66: #{tpu_custom_call.1} parent=43 // pred_check_branch
          %1638 = sbr.rel (%p1636) target = $region68
        $region67: #{tpu_custom_call.1} parent=43 // pred_region
          %s1639 = smul.u32 4, %s27
          %1641 = vsyncadd %s1632, 0
          %s1642 = smul.addr %s1639, 8
          %s1643 = scalar_lea.hbm %s6, %s1642
          %s1645 = sshll.u32 %s1635, 4
          %s1646 = int_to_ptr.vmem [resolvable:$true] %s1645
          %s1647 = sshll.u32 %s1643, 4
          %s1648 = int_to_ptr.hbm [resolvable:$true] %s1647
          %1650 = dma.vmem_to_hbm [thread:$0]  %s1646, 512, %s1648, %s1632
        $region68: #{tpu_custom_call.1} parent=43 // pred_fallthru
          _
      $region44: #{tpu_custom_call.1} parent=5 // pred_fallthru
        _
      %p1651 = scmp.le.s32.totalorder 2, %s22
      // Predicated region
      $region69: #{tpu_custom_call.1} parent=5 // pred_check
        %p1652 = pneg %p1651
      $region70: #{tpu_custom_call.1} parent=5 // pred_check_branch
        %1654 = sbr.rel (%p1652) target = $region72
      $region71: #{tpu_custom_call.1} parent=5 // pred_region
        %s1655 = ssub.s32 %s22, 2
        // Predicated region
        $region73: #{tpu_custom_call.1} parent=71 // pred_check
          %p1656 = pneg %p187
        $region74: #{tpu_custom_call.1} parent=71 // pred_check_branch
          %1658 = sbr.rel (%p1656) target = $region76
        $region75: #{tpu_custom_call.1} parent=71 // pred_region
          %s1659 = sand.u32 %s172, 1
          %s1660 = scalar_lea.sflag [#allocation4], %s1659
          %s1661 = sand.u32 %s172, 1
          %s1662 = smul.addr %s1661, 32
          %s1663 = scalar_lea.vmem [#allocation11], %s1662
          %1665 = dma.done %s1660, 512
        $region76: #{tpu_custom_call.1} parent=71 // pred_fallthru
          _
      $region72: #{tpu_custom_call.1} parent=5 // pred_fallthru
        _
    $region6: #{tpu_custom_call.1} parent=1 // loop_footer
      %s26 = sadd.s32 1, %s22
    $region7: #{tpu_custom_call.1} parent=1 // loop_footer_branch
      %21 = sbr.rel target = $region3
    $region8: #{tpu_custom_call.1} parent=1 // loop_exit
      _
    %1666 = vsyncpa [#allocation3], 1
    %s1667 = scalar_lea.sflag [#allocation3], 1
    %1668 = vsyncpa %s1667, 1
    %1669 = vsyncpa [#allocation6], 1
    %s1670 = scalar_lea.sflag [#allocation6], 1
    %1671 = vsyncpa %s1670, 1
    %1672 = vsyncpa [#allocation9], 1
    %1673 = vsyncpa [#allocation4], 1
    %s1674 = scalar_lea.sflag [#allocation4], 1
    %1675 = vsyncpa %s1674, 1

</llo_original>
